<compile_context>
chip_gen: v7x
topology: tpu7x:2x2x1
jax: 0.10.0
libtpu: 0.0.40
codegen_flags: <defaults>
</compile_context>

<pallas_src>
import functools

import jax
import jax.numpy as jnp
from jax.experimental import pallas as pl
from jax.experimental.pallas import tpu as pltpu

BN_EPS = 1e-5


def _conv_stats_kernel(xp_ref, w_ref, y_ref, sum_ref, sqsum_ref):
    """3x3 conv (padding/halo pre-applied) + per-tile partial BN statistics.

    xp_ref:    (th+2, W+2, Cin)   haloed input row-tile
    w_ref:     (9*Cin, Cout)      conv taps, K ordered (ky, kx, cin)
    y_ref:     (Cout, th*W)       lane-dense conv output tile
    sum_ref:   (Cout, 1)          per-tile channel sum
    sqsum_ref: (Cout, 1)          per-tile channel sum of squares
    """
    thp, wp, cin = xp_ref.shape
    th, wd = thp - 2, wp - 2

    x = xp_ref[...]
    # im2col built once per tile; the reshape only merges the leading dims.
    cols = [x[ky:ky + th, kx:kx + wd, :] for ky in range(3) for kx in range(3)]
    patch = jnp.concatenate(cols, axis=-1).reshape(th * wd, 9 * cin)

    # Single K=9*Cin matmul on the MXU; transpose the small (th*W, Cout)
    # result so the spatial dimension lands on lanes -> lane-dense stores.
    acc = jnp.dot(patch, w_ref[...], preferred_element_type=jnp.float32).T

    # Partial batch statistics (finalized across all tiles in the wrapper).
    sum_ref[...] = jnp.sum(acc, axis=1, keepdims=True)
    sqsum_ref[...] = jnp.sum(acc * acc, axis=1, keepdims=True)
    y_ref[...] = acc


def _bn_relu_kernel(y_ref, scale_ref, shift_ref, o_ref):
    """Fused BN affine (pre-folded per-channel scale/shift) + ReLU."""
    o_ref[...] = jnp.maximum(y_ref[...] * scale_ref[...] + shift_ref[...], 0.0)


def _pick_tile_h(h, tile_h):
    """Largest divisor of h that is <= tile_h (falls back to full h)."""
    for t in range(min(tile_h, h), 0, -1):
        if h % t == 0:
            return t
    return h


@functools.partial(jax.jit, static_argnames=("tile_h", "compute_dtype"))
def plain_forward(x_nchw, w_oihw, bias, gamma, beta, *, tile_h=8,
                  compute_dtype=jnp.float32):
    """NCHW in / NCHW out, matching Plain.forward (training-mode BatchNorm)."""
    del bias  # conv bias cancels exactly against the BN mean subtraction
    n, cin, h, wd = x_nchw.shape
    cout = w_oihw.shape[0]
    th = _pick_tile_h(h, tile_h)
    nt = h // th
    lanes = th * wd

    # ---- wrapper glue: layout, padding, haloed row tiles, weight layout ----
    x_nhwc = jnp.transpose(x_nchw, (0, 2, 3, 1)).astype(compute_dtype)
    x_pad = jnp.pad(x_nhwc, ((0, 0), (1, 1), (1, 1), (0, 0)))
    # overlapped row tiles with a 2-row halo: (N, nt, th+2, W+2, Cin)
    x_tiled = jnp.stack(
        [x_pad[:, r * th:r * th + th + 2] for r in range(nt)], axis=1)
    # (Cout, Cin, 3, 3) -> (ky, kx, Cin, Cout) -> (9*Cin, Cout)
    w_k = jnp.transpose(w_oihw, (2, 3, 1, 0)).reshape(9 * cin, cout)
    w_k = w_k.astype(compute_dtype)

    grid = (n, nt)
    cparams = pltpu.CompilerParams(
        dimension_semantics=("parallel", "parallel"),  # independent tiles
        vmem_limit_bytes=64 * 1024 * 1024,
    )

    # ---- pass 1: conv + per-tile partial stats ----
    y_tiled, sum_part, sqsum_part = pl.pallas_call(
        _conv_stats_kernel,
        grid=grid,
        in_specs=[
            pl.BlockSpec((None, None, th + 2, wd + 2, cin),
                         lambda i, j: (i, j, 0, 0, 0)),
            pl.BlockSpec((9 * cin, cout), lambda i, j: (0, 0)),
        ],
        out_specs=(
            pl.BlockSpec((None, None, cout, lanes), lambda i, j: (i, j, 0, 0)),
            pl.BlockSpec((None, None, cout, 1), lambda i, j: (i, j, 0, 0)),
            pl.BlockSpec((None, None, cout, 1), lambda i, j: (i, j, 0, 0)),
        ),
        out_shape=(
            jax.ShapeDtypeStruct((n, nt, cout, lanes), jnp.float32),
            jax.ShapeDtypeStruct((n, nt, cout, 1), jnp.float32),
            jax.ShapeDtypeStruct((n, nt, cout, 1), jnp.float32),
        ),
        compiler_params=cparams,
        cost_estimate=pl.CostEstimate(
            flops=2 * n * h * wd * 9 * cin * cout,
            transcendentals=0,
            bytes_accessed=4 * (int(x_tiled.size) + int(w_k.size)
                                + n * h * wd * cout + 2 * n * nt * cout),
        ),
    )(x_tiled, w_k)

    # ---- finalize batch stats (tiny) & fold BN affine into scale/shift ----
    count = jnp.float32(n * h * wd)
    ch_sum = jnp.sum(sum_part, axis=(0, 1, 3))
    ch_sqsum = jnp.sum(sqsum_part, axis=(0, 1, 3))
    mean = ch_sum / count
    var = jnp.maximum(ch_sqsum / count - mean * mean, 0.0)  # biased (training) var
    scale = gamma.astype(jnp.float32) * jax.lax.rsqrt(var + BN_EPS)
    shift = beta.astype(jnp.float32) - mean * scale
    scale_col = scale.reshape(cout, 1)
    shift_col = shift.reshape(cout, 1)

    # ---- pass 2: y * scale + shift, ReLU (lane-dense elementwise) ----
    out_tiled = pl.pallas_call(
        _bn_relu_kernel,
        grid=grid,
        in_specs=[
            pl.BlockSpec((None, None, cout, lanes), lambda i, j: (i, j, 0, 0)),
            pl.BlockSpec((cout, 1), lambda i, j: (0, 0)),
            pl.BlockSpec((cout, 1), lambda i, j: (0, 0)),
        ],
        out_specs=pl.BlockSpec((None, None, cout, lanes),
                               lambda i, j: (i, j, 0, 0)),
        out_shape=jax.ShapeDtypeStruct((n, nt, cout, lanes), jnp.float32),
        compiler_params=cparams,
        cost_estimate=pl.CostEstimate(
            flops=3 * n * h * wd * cout,
            transcendentals=0,
            bytes_accessed=4 * 2 * n * h * wd * cout,
        ),
    )(y_tiled, scale_col, shift_col)

    # (N, nt, Cout, th*W) -> (N, Cout, H, W)
    out = out_tiled.reshape(n, nt, cout, th, wd)
    return jnp.transpose(out, (0, 2, 1, 3, 4)).reshape(n, cout, h, wd)


def reference_forward(x_nchw, w_oihw, bias, gamma, beta):
    y = jax.lax.conv_general_dilated(
        x_nchw, w_oihw, window_strides=(1, 1), padding=((1, 1), (1, 1)),
        dimension_numbers=("NCHW", "OIHW", "NCHW"),
    )
    y = y + bias[None, :, None, None]
    mean = y.mean(axis=(0, 2, 3), keepdims=True)
    var = ((y - mean) ** 2).mean(axis=(0, 2, 3), keepdims=True)
    y = (y - mean) * jax.lax.rsqrt(var + BN_EPS)
    y = y * gamma[None, :, None, None] + beta[None, :, None, None]
    return jnp.maximum(y, 0.0)


if __name__ == "__main__":
    N, Cin, Cout, H, W = 2, 4, 8, 16, 16

    key = jax.random.PRNGKey(0)
    kx_, kw_, kb_, kg_, kbe_ = jax.random.split(key, 5)
    x = jax.random.normal(kx_, (N, Cin, H, W), jnp.float32)
    w = jax.random.normal(kw_, (Cout, Cin, 3, 3), jnp.float32) * 0.1
    b = jax.random.normal(kb_, (Cout,), jnp.float32) * 0.1
    gamma = 1.0 + 0.1 * jax.random.normal(kg_, (Cout,), jnp.float32)
    beta = 0.1 * jax.random.normal(kbe_, (Cout,), jnp.float32)

    out = plain_forward(x, w, b, gamma, beta)
    jax.block_until_ready(out)

    ref = reference_forward(x, w, b, gamma, beta)
    assert out.shape == (N, Cout, H, W)
    assert jnp.allclose(out, ref, atol=2e-4, rtol=2e-4), "mismatch vs JAX reference"

    print("KERNEL_OK")
</pallas_src>

<mosaic_0001>
module attributes {stable_mosaic.version = 11 : i64} {
  func.func @_conv_stats_kernel(%arg0: i32, %arg1: i32, %arg2: memref<1x1x10x18x4xf32, #tpu.memory_space<vmem>>, %arg3: memref<36x8xf32, #tpu.memory_space<vmem>>, %arg4: memref<1x1x8x128xf32, #tpu.memory_space<vmem>>, %arg5: memref<1x1x8x1xf32, #tpu.memory_space<vmem>>, %arg6: memref<1x1x8x1xf32, #tpu.memory_space<vmem>>) attributes {dimension_semantics = [#tpu.dimension_semantics<parallel>, #tpu.dimension_semantics<parallel>], iteration_bounds = array<i64: 2, 2>, scalar_prefetch = 0 : i64, scratch_operands = 0 : i64, tpu.core_type = #tpu.core_type<tc>, window_params = [{transform_indices = @transform_0, window_bounds = array<i64: 1, 1, 10, 18, 4>}, {pipeline_mode = #tpu.pipeline_mode<synchronous>, transform_indices = @transform_1, window_bounds = array<i64: 36, 8>}, {transform_indices = @transform_2, window_bounds = array<i64: 1, 1, 8, 128>}, {transform_indices = @transform_3, window_bounds = array<i64: 1, 1, 8, 1>}, {transform_indices = @transform_4, window_bounds = array<i64: 1, 1, 8, 1>}]} {
    %c0 = arith.constant 0 : index
    %c0_0 = arith.constant 0 : index
    %c0_1 = arith.constant 0 : index
    %c0_2 = arith.constant 0 : index
    %c0_3 = arith.constant 0 : index
    %0 = vector.load %arg2[%c0, %c0_0, %c0_1, %c0_2, %c0_3] : memref<1x1x10x18x4xf32, #tpu.memory_space<vmem>>, vector<1x1x10x18x4xf32>
    %1 = vector.shape_cast %0 : vector<1x1x10x18x4xf32> to vector<10x18x4xf32>
    %2 = vector.extract_strided_slice %1 {offsets = [0, 0, 0], sizes = [8, 16, 4], strides = [1, 1, 1]} : vector<10x18x4xf32> to vector<8x16x4xf32>
    %3 = vector.extract_strided_slice %1 {offsets = [0, 1, 0], sizes = [8, 16, 4], strides = [1, 1, 1]} : vector<10x18x4xf32> to vector<8x16x4xf32>
    %4 = vector.extract_strided_slice %1 {offsets = [0, 2, 0], sizes = [8, 16, 4], strides = [1, 1, 1]} : vector<10x18x4xf32> to vector<8x16x4xf32>
    %5 = vector.extract_strided_slice %1 {offsets = [1, 0, 0], sizes = [8, 16, 4], strides = [1, 1, 1]} : vector<10x18x4xf32> to vector<8x16x4xf32>
    %6 = vector.extract_strided_slice %1 {offsets = [1, 1, 0], sizes = [8, 16, 4], strides = [1, 1, 1]} : vector<10x18x4xf32> to vector<8x16x4xf32>
    %7 = vector.extract_strided_slice %1 {offsets = [1, 2, 0], sizes = [8, 16, 4], strides = [1, 1, 1]} : vector<10x18x4xf32> to vector<8x16x4xf32>
    %8 = vector.extract_strided_slice %1 {offsets = [2, 0, 0], sizes = [8, 16, 4], strides = [1, 1, 1]} : vector<10x18x4xf32> to vector<8x16x4xf32>
    %9 = vector.extract_strided_slice %1 {offsets = [2, 1, 0], sizes = [8, 16, 4], strides = [1, 1, 1]} : vector<10x18x4xf32> to vector<8x16x4xf32>
    %10 = vector.extract_strided_slice %1 {offsets = [2, 2, 0], sizes = [8, 16, 4], strides = [1, 1, 1]} : vector<10x18x4xf32> to vector<8x16x4xf32>
    %11 = tpu.concatenate %2, %3, %4, %5, %6, %7, %8, %9, %10 in 2 : vector<8x16x4xf32>, vector<8x16x4xf32>, vector<8x16x4xf32>, vector<8x16x4xf32>, vector<8x16x4xf32>, vector<8x16x4xf32>, vector<8x16x4xf32>, vector<8x16x4xf32>, vector<8x16x4xf32> -> vector<8x16x36xf32>
    %12 = vector.shape_cast %11 : vector<8x16x36xf32> to vector<128x36xf32>
    %c0_4 = arith.constant 0 : index
    %c0_5 = arith.constant 0 : index
    %13 = vector.load %arg3[%c0_4, %c0_5] : memref<36x8xf32, #tpu.memory_space<vmem>>, vector<36x8xf32>
    %cst = arith.constant dense<0.000000e+00> : vector<128x8xf32>
    %14 = tpu.matmul %12, %13, %cst {dimension_numbers = #tpu.dot_dimension_numbers<[1], [0], [0], [1], [0, 0, 1, 1], [], []>} : vector<128x36xf32>, vector<36x8xf32>, vector<128x8xf32> -> vector<128x8xf32>
    %15 = tpu.transpose %14, [1, 0] : vector<128x8xf32> -> vector<8x128xf32>
    %cst_6 = arith.constant dense<0.000000e+00> : vector<8xf32>
    %16 = vector.multi_reduction <add>, %15, %cst_6 [1] : vector<8x128xf32> to vector<8xf32>
    %17 = vector.shape_cast %16 : vector<8xf32> to vector<8x1xf32>
    %c0_7 = arith.constant 0 : index
    %c0_8 = arith.constant 0 : index
    %c0_9 = arith.constant 0 : index
    %c0_10 = arith.constant 0 : index
    %18 = vector.load %arg5[%c0_7, %c0_8, %c0_9, %c0_10] : memref<1x1x8x1xf32, #tpu.memory_space<vmem>>, vector<1x1x8x1xf32>
    %19 = vector.shape_cast %18 : vector<1x1x8x1xf32> to vector<8x1xf32>
    %20 = vector.shape_cast %17 : vector<8x1xf32> to vector<1x1x8x1xf32>
    tpu.vector_store %arg5[%c0_7, %c0_8, %c0_9, %c0_10], %20 {strides = array<i32>} : memref<1x1x8x1xf32, #tpu.memory_space<vmem>>, vector<1x1x8x1xf32>,
    %21 = arith.mulf %15, %15 : vector<8x128xf32>
    %cst_11 = arith.constant dense<0.000000e+00> : vector<8xf32>
    %22 = vector.multi_reduction <add>, %21, %cst_11 [1] : vector<8x128xf32> to vector<8xf32>
    %23 = vector.shape_cast %22 : vector<8xf32> to vector<8x1xf32>
    %c0_12 = arith.constant 0 : index
    %c0_13 = arith.constant 0 : index
    %c0_14 = arith.constant 0 : index
    %c0_15 = arith.constant 0 : index
    %24 = vector.load %arg6[%c0_12, %c0_13, %c0_14, %c0_15] : memref<1x1x8x1xf32, #tpu.memory_space<vmem>>, vector<1x1x8x1xf32>
    %25 = vector.shape_cast %24 : vector<1x1x8x1xf32> to vector<8x1xf32>
    %26 = vector.shape_cast %23 : vector<8x1xf32> to vector<1x1x8x1xf32>
    tpu.vector_store %arg6[%c0_12, %c0_13, %c0_14, %c0_15], %26 {strides = array<i32>} : memref<1x1x8x1xf32, #tpu.memory_space<vmem>>, vector<1x1x8x1xf32>,
    %c0_16 = arith.constant 0 : index
    %c0_17 = arith.constant 0 : index
    %c0_18 = arith.constant 0 : index
    %c0_19 = arith.constant 0 : index
    %27 = vector.load %arg4[%c0_16, %c0_17, %c0_18, %c0_19] : memref<1x1x8x128xf32, #tpu.memory_space<vmem>>, vector<1x1x8x128xf32>
    %28 = vector.shape_cast %27 : vector<1x1x8x128xf32> to vector<8x128xf32>
    %29 = vector.shape_cast %15 : vector<8x128xf32> to vector<1x1x8x128xf32>
    tpu.vector_store %arg4[%c0_16, %c0_17, %c0_18, %c0_19], %29 {strides = array<i32>} : memref<1x1x8x128xf32, #tpu.memory_space<vmem>>, vector<1x1x8x128xf32>,
    return
  }
  func.func @transform_0(%arg0: i32, %arg1: i32) -> (i32, i32, i32, i32, i32) {
    %c0_i32 = arith.constant 0 : i32
    %c0_i32_0 = arith.constant 0 : i32
    %c0_i32_1 = arith.constant 0 : i32
    %c0_i32_2 = arith.constant 0 : i32
    return %arg0, %arg1, %c0_i32, %c0_i32_0, %c0_i32_1 : i32, i32, i32, i32, i32
  }
  func.func @transform_1(%arg0: i32, %arg1: i32) -> (i32, i32) {
    %c0_i32 = arith.constant 0 : i32
    %c0_i32_0 = arith.constant 0 : i32
    %c0_i32_1 = arith.constant 0 : i32
    return %c0_i32, %c0_i32_0 : i32, i32
  }
  func.func @transform_2(%arg0: i32, %arg1: i32) -> (i32, i32, i32, i32) {
    %c0_i32 = arith.constant 0 : i32
    %c0_i32_0 = arith.constant 0 : i32
    %c0_i32_1 = arith.constant 0 : i32
    return %arg0, %arg1, %c0_i32, %c0_i32_0 : i32, i32, i32, i32
  }
  func.func @transform_3(%arg0: i32, %arg1: i32) -> (i32, i32, i32, i32) {
    %c0_i32 = arith.constant 0 : i32
    %c0_i32_0 = arith.constant 0 : i32
    %c0_i32_1 = arith.constant 0 : i32
    return %arg0, %arg1, %c0_i32, %c0_i32_0 : i32, i32, i32, i32
  }
  func.func @transform_4(%arg0: i32, %arg1: i32) -> (i32, i32, i32, i32) {
    %c0_i32 = arith.constant 0 : i32
    %c0_i32_0 = arith.constant 0 : i32
    %c0_i32_1 = arith.constant 0 : i32
    return %arg0, %arg1, %c0_i32, %c0_i32_0 : i32, i32, i32, i32
  }
}

module attributes {stable_mosaic.version = 11 : i64} {
  func.func @_bn_relu_kernel(%arg0: i32, %arg1: i32, %arg2: memref<1x1x8x128xf32, #tpu.memory_space<vmem>>, %arg3: memref<8x1xf32, #tpu.memory_space<vmem>>, %arg4: memref<8x1xf32, #tpu.memory_space<vmem>>, %arg5: memref<1x1x8x128xf32, #tpu.memory_space<vmem>>) attributes {dimension_semantics = [#tpu.dimension_semantics<parallel>, #tpu.dimension_semantics<parallel>], iteration_bounds = array<i64: 2, 2>, scalar_prefetch = 0 : i64, scratch_operands = 0 : i64, tpu.core_type = #tpu.core_type<tc>, window_params = [{transform_indices = @transform_0, window_bounds = array<i64: 1, 1, 8, 128>}, {pipeline_mode = #tpu.pipeline_mode<synchronous>, transform_indices = @transform_1, window_bounds = array<i64: 8, 1>}, {pipeline_mode = #tpu.pipeline_mode<synchronous>, transform_indices = @transform_2, window_bounds = array<i64: 8, 1>}, {transform_indices = @transform_3, window_bounds = array<i64: 1, 1, 8, 128>}]} {
    %c0 = arith.constant 0 : index
    %c0_0 = arith.constant 0 : index
    %c0_1 = arith.constant 0 : index
    %c0_2 = arith.constant 0 : index
    %0 = vector.load %arg2[%c0, %c0_0, %c0_1, %c0_2] : memref<1x1x8x128xf32, #tpu.memory_space<vmem>>, vector<1x1x8x128xf32>
    %1 = vector.shape_cast %0 : vector<1x1x8x128xf32> to vector<8x128xf32>
    %c0_3 = arith.constant 0 : index
    %c0_4 = arith.constant 0 : index
    %2 = vector.load %arg3[%c0_3, %c0_4] : memref<8x1xf32, #tpu.memory_space<vmem>>, vector<8x1xf32>
    %3 = vector.broadcast %2 : vector<8x1xf32> to vector<8x128xf32>
    %4 = arith.mulf %1, %3 : vector<8x128xf32>
    %c0_5 = arith.constant 0 : index
    %c0_6 = arith.constant 0 : index
    %5 = vector.load %arg4[%c0_5, %c0_6] : memref<8x1xf32, #tpu.memory_space<vmem>>, vector<8x1xf32>
    %6 = vector.broadcast %5 : vector<8x1xf32> to vector<8x128xf32>
    %7 = arith.addf %4, %6 : vector<8x128xf32>
    %cst = arith.constant 0.000000e+00 : f32
    %8 = vector.broadcast %cst : f32 to vector<8x128xf32>
    %9 = arith.maximumf %7, %8 : vector<8x128xf32>
    %c0_7 = arith.constant 0 : index
    %c0_8 = arith.constant 0 : index
    %c0_9 = arith.constant 0 : index
    %c0_10 = arith.constant 0 : index
    %10 = vector.load %arg5[%c0_7, %c0_8, %c0_9, %c0_10] : memref<1x1x8x128xf32, #tpu.memory_space<vmem>>, vector<1x1x8x128xf32>
    %11 = vector.shape_cast %10 : vector<1x1x8x128xf32> to vector<8x128xf32>
    %12 = vector.shape_cast %9 : vector<8x128xf32> to vector<1x1x8x128xf32>
    tpu.vector_store %arg5[%c0_7, %c0_8, %c0_9, %c0_10], %12 {strides = array<i32>} : memref<1x1x8x128xf32, #tpu.memory_space<vmem>>, vector<1x1x8x128xf32>,
    return
  }
  func.func @transform_0(%arg0: i32, %arg1: i32) -> (i32, i32, i32, i32) {
    %c0_i32 = arith.constant 0 : i32
    %c0_i32_0 = arith.constant 0 : i32
    %c0_i32_1 = arith.constant 0 : i32
    return %arg0, %arg1, %c0_i32, %c0_i32_0 : i32, i32, i32, i32
  }
  func.func @transform_1(%arg0: i32, %arg1: i32) -> (i32, i32) {
    %c0_i32 = arith.constant 0 : i32
    %c0_i32_0 = arith.constant 0 : i32
    %c0_i32_1 = arith.constant 0 : i32
    return %c0_i32, %c0_i32_0 : i32, i32
  }
  func.func @transform_2(%arg0: i32, %arg1: i32) -> (i32, i32) {
    %c0_i32 = arith.constant 0 : i32
    %c0_i32_0 = arith.constant 0 : i32
    %c0_i32_1 = arith.constant 0 : i32
    return %c0_i32, %c0_i32_0 : i32, i32
  }
  func.func @transform_3(%arg0: i32, %arg1: i32) -> (i32, i32, i32, i32) {
    %c0_i32 = arith.constant 0 : i32
    %c0_i32_0 = arith.constant 0 : i32
    %c0_i32_1 = arith.constant 0 : i32
    return %arg0, %arg1, %c0_i32, %c0_i32_0 : i32, i32, i32, i32
  }
}

</mosaic_0001>

<llo_original>
// kernel: plain_forward.3
$region0: #{plain_forward.3}
  #allocation0 [shape = 'u32[]', space=smem, size = 0x4, offset = 0x4, fixed_abs, tag = 'smem constant byte address 0x4 - core index']
  #allocation1 [shape = 'u32[144,128]{1,0:T(1,128)}', space=vmem, size = 0x12000, scoped, tag = 'internal scratch']
  %s0 = inlined_call_operand.hbm [shape: f32[2,2,8,128], index: 0, kind: input, shape index: {}]
  %s1 = inlined_call_operand.hbm [shape: f32[8,1], index: 1, kind: input, shape index: {}]
  %s2 = inlined_call_operand.hbm [shape: f32[8,1], index: 2, kind: input, shape index: {}]
  %s3 = inlined_call_operand.hbm [shape: f32[2,2,8,128], index: 3, kind: output, shape index: {}]
  %s4 = sld [smem:[#allocation0]]
  $region57: #{plain_forward.3} parent=0
    _
  %s6 = ssub.s32 1, %s4
  %s7 = scalar_select 0, %s6, %s4
  $region1: #{plain_forward.3} parent=0
    #allocation2 [shape = 'u8[8192]{0}', space=vmem, size = 0x2000, scoped, tag = 'input window, operand 0']
    #allocation3 [shape = 's32[2]{0}', space=sflag, size = 0x8, scoped, tag = 'scoped memory for plain_forward.3']
    #allocation4 [shape = 's32[2]{0}', space=sflag, size = 0x8, scoped, tag = 'scoped memory for plain_forward.3']
    #allocation5 [shape = 'u8[4096]{0}', space=vmem, size = 0x1000, scoped, tag = 'input window, operand 1, single buffered']
    #allocation6 [shape = 's32[1]{0}', space=sflag, size = 0x4, scoped, tag = 'scoped memory for plain_forward.3']
    #allocation7 [shape = 'u8[4096]{0}', space=vmem, size = 0x1000, scoped, tag = 'input window, operand 2, single buffered']
    #allocation8 [shape = 'u8[8192]{0}', space=vmem, size = 0x2000, scoped, tag = 'output window, operand 0']
    %8 = vsyncpa [#allocation3], 0
    %s9 = scalar_lea.sflag [#allocation3], 1
    %10 = vsyncpa %s9, 0
    %11 = vsyncpa [#allocation6], 0
    %12 = vsyncpa [#allocation4], 0
    %s13 = scalar_lea.sflag [#allocation4], 1
    %14 = vsyncpa %s13, 0
    loop: start=0, step=1, limit=6
    $region2: #{plain_forward.3} parent=1 // loop_pre_header
      _
    $region3: #{plain_forward.3} parent=1 // loop_header
      %s16 = sphi 0, %s20
      %p17 = scmp.ge.s32.totalorder %s16, 6
      %s23 = sphi 0, %s35
      %s24 = sphi 0, %s31
      %s25 = sphi 0, %s23
      %s26 = sphi 0, %s24
      %s27 = sphi 0, %s25
      %s28 = sphi 0, %s26
      %s40 = sphi 0, %s42
      %s43 = sphi 0, %s40
      %s44 = sphi 0, %s43
      %s60 = sphi 0, %s44
      %s64 = sphi 0, %s64
      %s66 = sphi 0, %s64
      %s67 = sphi 0, %s66
      %s81 = sphi 0, %s67
      %s85 = sphi 0, %s85
      %s87 = sphi 0, %s85
      %s88 = sphi 0, %s87
      %s102 = sphi 0, %s88
      %s110 = sphi 0, %s112
      %s113 = sphi 0, %s110
      %s114 = sphi 0, %s113
      %s130 = sphi 0, %s114
    $region4: #{plain_forward.3} parent=1 // loop_header_branch
      %19 = sbr.rel (%p17) target = $region8
    $region5: #{plain_forward.3} parent=1 // loop_body
      %s21 = ssub.s32 %s16, 1
      %s22 = ssub.s32 %s16, 2
      %s29 = sadd.s32 1, %s24
      %p30 = scmp.ge.s32.totalorder %s29, 2
      %s31 = scalar_select %p30, 0, %s29
      %s32 = sadd.s32 1, %s23
      %s33 = scalar_select %p30, %s32, %s23
      %p34 = scmp.ge.s32.totalorder %s33, 2
      %s35 = scalar_select %p34, 0, %s33
      %s36 = ssub.s32 %s23, %s35
      %s37 = ssub.s32 %s24, %s31
      %s38 = sor.u32 %s36, %s37
      %p39 = scmp.eq.s32.totalorder %s38, 0
      %s41 = sadd.s32 %s40, 1
      %s42 = scalar_select %p39, %s40, %s41
      %p45 = pneg %p39
      %p46 = scmp.eq.s32.totalorder %s16, 3
      %p47 = por %p45, %p46
      %p48 = scmp.ne.s32.totalorder %s40, %s43
      %p49 = scmp.eq.s32.totalorder %s16, 0
      %p50 = por %p48, %p49
      %p51 = scmp.ne.s32.totalorder %s40, %s43
      %p52 = scmp.eq.s32.totalorder %s21, 3
      %p53 = por %p51, %p52
      %p54 = scmp.ne.s32.totalorder %s43, %s44
      %p55 = scmp.eq.s32.totalorder %s21, 0
      %p56 = por %p54, %p55
      %p57 = scmp.ne.s32.totalorder %s43, %s44
      %p58 = scmp.eq.s32.totalorder %s22, 3
      %p59 = por %p57, %p58
      %p61 = scmp.ne.s32.totalorder %s44, %s60
      %p62 = scmp.eq.s32.totalorder %s22, 0
      %p63 = por %p61, %p62
      %s65 = sadd.s32 %s64, 1
      %p68 = scmp.eq.s32.totalorder %s16, 3
      %p69 = scmp.ne.s32.totalorder %s64, %s66
      %p70 = scmp.eq.s32.totalorder %s16, 0
      %p71 = por %p69, %p70
      %p72 = scmp.ne.s32.totalorder %s64, %s66
      %p73 = scmp.eq.s32.totalorder %s21, 3
      %p74 = por %p72, %p73
      %p75 = scmp.ne.s32.totalorder %s66, %s67
      %p76 = scmp.eq.s32.totalorder %s21, 0
      %p77 = por %p75, %p76
      %p78 = scmp.ne.s32.totalorder %s66, %s67
      %p79 = scmp.eq.s32.totalorder %s22, 3
      %p80 = por %p78, %p79
      %p82 = scmp.ne.s32.totalorder %s67, %s81
      %p83 = scmp.eq.s32.totalorder %s22, 0
      %p84 = por %p82, %p83
      %s86 = sadd.s32 %s85, 1
      %p89 = scmp.eq.s32.totalorder %s16, 3
      %p90 = scmp.ne.s32.totalorder %s85, %s87
      %p91 = scmp.eq.s32.totalorder %s16, 0
      %p92 = por %p90, %p91
      %p93 = scmp.ne.s32.totalorder %s85, %s87
      %p94 = scmp.eq.s32.totalorder %s21, 3
      %p95 = por %p93, %p94
      %p96 = scmp.ne.s32.totalorder %s87, %s88
      %p97 = scmp.eq.s32.totalorder %s21, 0
      %p98 = por %p96, %p97
      %p99 = scmp.ne.s32.totalorder %s87, %s88
      %p100 = scmp.eq.s32.totalorder %s22, 3
      %p101 = por %p99, %p100
      %p103 = scmp.ne.s32.totalorder %s88, %s102
      %p104 = scmp.eq.s32.totalorder %s22, 0
      %p105 = por %p103, %p104
      %s106 = ssub.s32 %s23, %s35
      %s107 = ssub.s32 %s24, %s31
      %s108 = sor.u32 %s106, %s107
      %p109 = scmp.eq.s32.totalorder %s108, 0
      %s111 = sadd.s32 %s110, 1
      %s112 = scalar_select %p109, %s110, %s111
      %p115 = pneg %p109
      %p116 = scmp.eq.s32.totalorder %s16, 3
      %p117 = por %p115, %p116
      %p118 = scmp.ne.s32.totalorder %s110, %s113
      %p119 = scmp.eq.s32.totalorder %s16, 0
      %p120 = por %p118, %p119
      %p121 = scmp.ne.s32.totalorder %s110, %s113
      %p122 = scmp.eq.s32.totalorder %s21, 3
      %p123 = por %p121, %p122
      %p124 = scmp.ne.s32.totalorder %s113, %s114
      %p125 = scmp.eq.s32.totalorder %s21, 0
      %p126 = por %p124, %p125
      %p127 = scmp.ne.s32.totalorder %s113, %s114
      %p128 = scmp.eq.s32.totalorder %s22, 3
      %p129 = por %p127, %p128
      %p131 = scmp.ne.s32.totalorder %s114, %s130
      %p132 = scmp.eq.s32.totalorder %s22, 0
      %p133 = por %p131, %p132
      %p134 = scmp.le.s32.totalorder 1, %s16
      %p135 = scmp.lt.s32.totalorder %s16, 5
      %p136 = pnand %p134, %p135
      %p137 = pneg %p136
      // Predicated region
      $region9: #{plain_forward.3} parent=5 // pred_check
        _
      $region10: #{plain_forward.3} parent=5 // pred_check_branch
        %139 = sbr.rel (%p136) target = $region12
      $region11: #{plain_forward.3} parent=5 // pred_region
        %s140 = ssub.s32 %s16, 1
        // Predicated region
        $region13: #{plain_forward.3} parent=11 // pred_check
          %p141 = pneg %p77
        $region14: #{plain_forward.3} parent=11 // pred_check_branch
          %143 = sbr.rel (%p141) target = $region16
        $region15: #{plain_forward.3} parent=11 // pred_region
          %s145 = ssub.s32 128, 128
          %146 = vsyncadd [#allocation6], %s145
          %s148 = sshll.u32 [#allocation5], 4
          %s149 = int_to_ptr.vmem [resolvable:$true] %s148
          %151 = dma.hbm_to_vmem [thread:$0]  %s1, 128, %s149, [#allocation6]
        $region16: #{plain_forward.3} parent=11 // pred_fallthru
          _
        // Predicated region
        $region17: #{plain_forward.3} parent=11 // pred_check
          %p152 = pneg %p98
        $region18: #{plain_forward.3} parent=11 // pred_check_branch
          %154 = sbr.rel (%p152) target = $region20
        $region19: #{plain_forward.3} parent=11 // pred_region
          %s156 = ssub.s32 128, 128
          %157 = vsyncadd [#allocation6], %s156
          %s159 = sshll.u32 [#allocation7], 4
          %s160 = int_to_ptr.vmem [resolvable:$true] %s159
          %162 = dma.hbm_to_vmem [thread:$0]  %s2, 128, %s160, [#allocation6]
        $region20: #{plain_forward.3} parent=11 // pred_fallthru
          _
      $region12: #{plain_forward.3} parent=5 // pred_fallthru
        _
      %p163 = scmp.lt.s32.totalorder %s16, 4
      // Predicated region
      $region21: #{plain_forward.3} parent=5 // pred_check
        %p164 = pneg %p163
      $region22: #{plain_forward.3} parent=5 // pred_check_branch
        %166 = sbr.rel (%p164) target = $region24
      $region23: #{plain_forward.3} parent=5 // pred_region
        // Predicated region
        $region25: #{plain_forward.3} parent=23 // pred_check
          %p167 = pneg %p50
        $region26: #{plain_forward.3} parent=23 // pred_check_branch
          %169 = sbr.rel (%p167) target = $region28
        $region27: #{plain_forward.3} parent=23 // pred_region
          %s170 = sand.u32 %s40, 1
          %s171 = scalar_lea.sflag [#allocation3], %s170
          %s172 = sand.u32 %s40, 1
          %s173 = smul.addr %s172, 8
          %s174 = scalar_lea.vmem [#allocation2], %s173
          %s176 = ssub.s32 128, 128
          %177 = vsyncadd %s171, %s176
          %s178 = smul.addr %s23, 2
          %s179 = sadd.s32 %s24, %s178
          %s180 = smul.addr %s179, 128
          %s181 = scalar_lea.hbm %s0, %s180
          %s183 = sshll.u32 %s174, 4
          %s184 = int_to_ptr.vmem [resolvable:$true] %s183
          %186 = dma.hbm_to_vmem [thread:$0]  %s181, 128, %s184, %s171
        $region28: #{plain_forward.3} parent=23 // pred_fallthru
          _
      $region24: #{plain_forward.3} parent=5 // pred_fallthru
        _
      %p187 = scmp.le.s32.totalorder 1, %s16
      %p188 = scmp.lt.s32.totalorder %s16, 5
      %p189 = pnand %p187, %p188
      %p190 = pneg %p189
      // Predicated region
      $region29: #{plain_forward.3} parent=5 // pred_check
        _
      $region30: #{plain_forward.3} parent=5 // pred_check_branch
        %192 = sbr.rel (%p189) target = $region32
      $region31: #{plain_forward.3} parent=5 // pred_region
        %s193 = ssub.s32 %s16, 1
        %s194 = sand.u32 %s43, 1
        %s195 = scalar_lea.sflag [#allocation3], %s194
        %s196 = sand.u32 %s43, 1
        %s197 = smul.addr %s196, 8
        %s198 = scalar_lea.vmem [#allocation2], %s197
        // Predicated region
        $region33: #{plain_forward.3} parent=31 // pred_check
          %p199 = pneg %p56
        $region34: #{plain_forward.3} parent=31 // pred_check_branch
          %201 = sbr.rel (%p199) target = $region36
        $region35: #{plain_forward.3} parent=31 // pred_region
          %202 = dma.done %s195, 128
        $region36: #{plain_forward.3} parent=31 // pred_fallthru
          _
        // Predicated region
        $region37: #{plain_forward.3} parent=31 // pred_check
          %p203 = pneg %p77
        $region38: #{plain_forward.3} parent=31 // pred_check_branch
          %205 = sbr.rel (%p203) target = $region40
        $region39: #{plain_forward.3} parent=31 // pred_region
          %206 = dma.done [#allocation6], 128
        $region40: #{plain_forward.3} parent=31 // pred_fallthru
          _
        // Predicated region
        $region41: #{plain_forward.3} parent=31 // pred_check
          %p207 = pneg %p98
        $region42: #{plain_forward.3} parent=31 // pred_check_branch
          %209 = sbr.rel (%p207) target = $region44
        $region43: #{plain_forward.3} parent=31 // pred_region
          %210 = dma.done [#allocation6], 128
        $region44: #{plain_forward.3} parent=31 // pred_fallthru
          _
        %s211 = sand.u32 %s43, 1
        %s212 = scalar_lea.sflag [#allocation3], %s211
        %s213 = sand.u32 %s43, 1
        %s214 = smul.addr %s213, 8
        %s215 = scalar_lea.vmem [#allocation2], %s214
        %p216 = pneg %p56
        %p217 = pneg %p53
        %p218 = pneg %p77
        %p219 = pneg %p74
        %p220 = pneg %p98
        %p221 = pneg %p95
        %p222 = pneg %p126
        %p223 = pneg %p123
        %s224 = sand.u32 %s113, 1
        %s225 = scalar_lea.sflag [#allocation4], %s224
        %s226 = sand.u32 %s113, 1
        %s227 = smul.addr %s226, 8
        %s228 = scalar_lea.vmem [#allocation8], %s227
        %v229 = vld [vmem:[%s198] sm:$0xff]
        %v230 = vld [vmem:[#allocation5] sm:$0xff]
        %232 = vset.pattern.permute.xlu0 0
        %233 = vperm.xlu0 %232, %v230
        %v234 = vpop.permute.xlu0 %233
        %v236 = vmul.f32 %v229, %v234
        %v237 = vld [vmem:[#allocation7] sm:$0xff]
        %239 = vset.pattern.permute.xlu0 0
        %240 = vperm.xlu0 %239, %v237
        %v241 = vpop.permute.xlu0 %240
        %v243 = vadd.f32 %v236, %v241
        %v244 = vmax.f32 %v243, 0.0
        %245 = vst [vmem:[%s228] sm:$0xff] %v244
        %s246 = sand.u32 %s113, 1
        %s247 = scalar_lea.sflag [#allocation4], %s246
        %s248 = sand.u32 %s113, 1
        %s249 = smul.addr %s248, 8
        %s250 = scalar_lea.vmem [#allocation8], %s249
        // Predicated region
        $region45: #{plain_forward.3} parent=31 // pred_check
          %p251 = pneg %p123
        $region46: #{plain_forward.3} parent=31 // pred_check_branch
          %253 = sbr.rel (%p251) target = $region48
        $region47: #{plain_forward.3} parent=31 // pred_region
          %s255 = ssub.s32 128, 128
          %256 = vsyncadd %s247, %s255
          %s257 = smul.addr %s25, 2
          %s258 = sadd.s32 %s26, %s257
          %s259 = smul.addr %s258, 128
          %s260 = scalar_lea.hbm %s3, %s259
          %s262 = sshll.u32 %s250, 4
          %s263 = int_to_ptr.vmem [resolvable:$true] %s262
          %265 = dma.vmem_to_hbm [thread:$0]  %s263, 128, %s260, %s247
        $region48: #{plain_forward.3} parent=31 // pred_fallthru
          _
      $region32: #{plain_forward.3} parent=5 // pred_fallthru
        _
      %p266 = scmp.le.s32.totalorder 2, %s16
      // Predicated region
      $region49: #{plain_forward.3} parent=5 // pred_check
        %p267 = pneg %p266
      $region50: #{plain_forward.3} parent=5 // pred_check_branch
        %269 = sbr.rel (%p267) target = $region52
      $region51: #{plain_forward.3} parent=5 // pred_region
        %s270 = ssub.s32 %s16, 2
        // Predicated region
        $region53: #{plain_forward.3} parent=51 // pred_check
          %p271 = pneg %p129
        $region54: #{plain_forward.3} parent=51 // pred_check_branch
          %273 = sbr.rel (%p271) target = $region56
        $region55: #{plain_forward.3} parent=51 // pred_region
          %s274 = sand.u32 %s114, 1
          %s275 = scalar_lea.sflag [#allocation4], %s274
          %s276 = sand.u32 %s114, 1
          %s277 = smul.addr %s276, 8
          %s278 = scalar_lea.vmem [#allocation8], %s277
          %279 = dma.done %s275, 128
        $region56: #{plain_forward.3} parent=51 // pred_fallthru
          _
      $region52: #{plain_forward.3} parent=5 // pred_fallthru
        _
    $region6: #{plain_forward.3} parent=1 // loop_footer
      %s20 = sadd.s32 1, %s16
    $region7: #{plain_forward.3} parent=1 // loop_footer_branch
      %15 = sbr.rel target = $region3
    $region8: #{plain_forward.3} parent=1 // loop_exit
      _
    %280 = vsyncpa [#allocation3], 1
    %s281 = scalar_lea.sflag [#allocation3], 1
    %282 = vsyncpa %s281, 1
    %283 = vsyncpa [#allocation6], 1
    %284 = vsyncpa [#allocation4], 1
    %s285 = scalar_lea.sflag [#allocation4], 1
    %286 = vsyncpa %s285, 1

// kernel: plain_forward.2
$region0: #{plain_forward.2}
  #allocation0 [shape = 'u32[]', space=smem, size = 0x4, offset = 0x4, fixed_abs, tag = 'smem constant byte address 0x4 - core index']
  #allocation1 [shape = 'u32[144,128]{1,0:T(1,128)}', space=vmem, size = 0x12000, scoped, tag = 'internal scratch']
  %s0 = inlined_call_operand.hbm [shape: f32[2,2,10,18,4], index: 0, kind: input, shape index: {}]
  %s1 = inlined_call_operand.hbm [shape: f32[36,8], index: 1, kind: input, shape index: {}]
  %s2 = inlined_call_operand.hbm [shape: f32[2,2,8,128], index: 2, kind: output, shape index: {0}]
  %s3 = inlined_call_operand.hbm [shape: f32[2,2,8,1], index: 3, kind: output, shape index: {1}]
  %s4 = inlined_call_operand.hbm [shape: f32[2,2,8,1], index: 4, kind: output, shape index: {2}]
  %5 = xla_tuple %s2, %s3, %s4
  %s6 = sld [smem:[#allocation0]]
  $region65: #{plain_forward.2} parent=0
    _
  %s8 = ssub.s32 1, %s6
  %s9 = scalar_select 0, %s8, %s6
  $region1: #{plain_forward.2} parent=0
    #allocation2 [shape = 'u8[245760]{0}', space=vmem, size = 0x3c000, scoped, tag = 'input window, operand 0']
    #allocation3 [shape = 's32[2]{0}', space=sflag, size = 0x8, scoped, tag = 'scoped memory for plain_forward.2']
    #allocation4 [shape = 's32[2]{0}', space=sflag, size = 0x8, scoped, tag = 'scoped memory for plain_forward.2']
    #allocation5 [shape = 'u8[20480]{0}', space=vmem, size = 0x5000, scoped, tag = 'input window, operand 1, single buffered']
    #allocation6 [shape = 's32[1]{0}', space=sflag, size = 0x4, scoped, tag = 'scoped memory for plain_forward.2']
    #allocation7 [shape = 'u8[8192]{0}', space=vmem, size = 0x2000, scoped, tag = 'output window, operand 0']
    #allocation8 [shape = 'u8[8192]{0}', space=vmem, size = 0x2000, scoped, tag = 'output window, operand 1']
    #allocation9 [shape = 's32[2]{0}', space=sflag, size = 0x8, scoped, tag = 'scoped memory for plain_forward.2']
    #allocation10 [shape = 'u8[8192]{0}', space=vmem, size = 0x2000, scoped, tag = 'output window, operand 2']
    %10 = vsyncpa [#allocation3], 0
    %s11 = scalar_lea.sflag [#allocation3], 1
    %12 = vsyncpa %s11, 0
    %13 = vsyncpa [#allocation6], 0
    %14 = vsyncpa [#allocation4], 0
    %s15 = scalar_lea.sflag [#allocation4], 1
    %16 = vsyncpa %s15, 0
    %17 = vsyncpa [#allocation9], 0
    %s18 = scalar_lea.sflag [#allocation9], 1
    %19 = vsyncpa %s18, 0
    loop: start=0, step=1, limit=6
    $region2: #{plain_forward.2} parent=1 // loop_pre_header
      _
    $region3: #{plain_forward.2} parent=1 // loop_header
      %s21 = sphi 0, %s25
      %p22 = scmp.ge.s32.totalorder %s21, 6
      %s28 = sphi 0, %s40
      %s29 = sphi 0, %s36
      %s30 = sphi 0, %s28
      %s31 = sphi 0, %s29
      %s32 = sphi 0, %s30
      %s33 = sphi 0, %s31
      %s45 = sphi 0, %s47
      %s48 = sphi 0, %s45
      %s49 = sphi 0, %s48
      %s65 = sphi 0, %s49
      %s69 = sphi 0, %s69
      %s71 = sphi 0, %s69
      %s72 = sphi 0, %s71
      %s86 = sphi 0, %s72
      %s94 = sphi 0, %s96
      %s97 = sphi 0, %s94
      %s98 = sphi 0, %s97
      %s114 = sphi 0, %s98
      %s122 = sphi 0, %s124
      %s125 = sphi 0, %s122
      %s126 = sphi 0, %s125
      %s142 = sphi 0, %s126
      %s150 = sphi 0, %s152
      %s153 = sphi 0, %s150
      %s154 = sphi 0, %s153
      %s170 = sphi 0, %s154
    $region4: #{plain_forward.2} parent=1 // loop_header_branch
      %24 = sbr.rel (%p22) target = $region8
    $region5: #{plain_forward.2} parent=1 // loop_body
      %s26 = ssub.s32 %s21, 1
      %s27 = ssub.s32 %s21, 2
      %s34 = sadd.s32 1, %s29
      %p35 = scmp.ge.s32.totalorder %s34, 2
      %s36 = scalar_select %p35, 0, %s34
      %s37 = sadd.s32 1, %s28
      %s38 = scalar_select %p35, %s37, %s28
      %p39 = scmp.ge.s32.totalorder %s38, 2
      %s40 = scalar_select %p39, 0, %s38
      %s41 = ssub.s32 %s28, %s40
      %s42 = ssub.s32 %s29, %s36
      %s43 = sor.u32 %s41, %s42
      %p44 = scmp.eq.s32.totalorder %s43, 0
      %s46 = sadd.s32 %s45, 1
      %s47 = scalar_select %p44, %s45, %s46
      %p50 = pneg %p44
      %p51 = scmp.eq.s32.totalorder %s21, 3
      %p52 = por %p50, %p51
      %p53 = scmp.ne.s32.totalorder %s45, %s48
      %p54 = scmp.eq.s32.totalorder %s21, 0
      %p55 = por %p53, %p54
      %p56 = scmp.ne.s32.totalorder %s45, %s48
      %p57 = scmp.eq.s32.totalorder %s26, 3
      %p58 = por %p56, %p57
      %p59 = scmp.ne.s32.totalorder %s48, %s49
      %p60 = scmp.eq.s32.totalorder %s26, 0
      %p61 = por %p59, %p60
      %p62 = scmp.ne.s32.totalorder %s48, %s49
      %p63 = scmp.eq.s32.totalorder %s27, 3
      %p64 = por %p62, %p63
      %p66 = scmp.ne.s32.totalorder %s49, %s65
      %p67 = scmp.eq.s32.totalorder %s27, 0
      %p68 = por %p66, %p67
      %s70 = sadd.s32 %s69, 1
      %p73 = scmp.eq.s32.totalorder %s21, 3
      %p74 = scmp.ne.s32.totalorder %s69, %s71
      %p75 = scmp.eq.s32.totalorder %s21, 0
      %p76 = por %p74, %p75
      %p77 = scmp.ne.s32.totalorder %s69, %s71
      %p78 = scmp.eq.s32.totalorder %s26, 3
      %p79 = por %p77, %p78
      %p80 = scmp.ne.s32.totalorder %s71, %s72
      %p81 = scmp.eq.s32.totalorder %s26, 0
      %p82 = por %p80, %p81
      %p83 = scmp.ne.s32.totalorder %s71, %s72
      %p84 = scmp.eq.s32.totalorder %s27, 3
      %p85 = por %p83, %p84
      %p87 = scmp.ne.s32.totalorder %s72, %s86
      %p88 = scmp.eq.s32.totalorder %s27, 0
      %p89 = por %p87, %p88
      %s90 = ssub.s32 %s28, %s40
      %s91 = ssub.s32 %s29, %s36
      %s92 = sor.u32 %s90, %s91
      %p93 = scmp.eq.s32.totalorder %s92, 0
      %s95 = sadd.s32 %s94, 1
      %s96 = scalar_select %p93, %s94, %s95
      %p99 = pneg %p93
      %p100 = scmp.eq.s32.totalorder %s21, 3
      %p101 = por %p99, %p100
      %p102 = scmp.ne.s32.totalorder %s94, %s97
      %p103 = scmp.eq.s32.totalorder %s21, 0
      %p104 = por %p102, %p103
      %p105 = scmp.ne.s32.totalorder %s94, %s97
      %p106 = scmp.eq.s32.totalorder %s26, 3
      %p107 = por %p105, %p106
      %p108 = scmp.ne.s32.totalorder %s97, %s98
      %p109 = scmp.eq.s32.totalorder %s26, 0
      %p110 = por %p108, %p109
      %p111 = scmp.ne.s32.totalorder %s97, %s98
      %p112 = scmp.eq.s32.totalorder %s27, 3
      %p113 = por %p111, %p112
      %p115 = scmp.ne.s32.totalorder %s98, %s114
      %p116 = scmp.eq.s32.totalorder %s27, 0
      %p117 = por %p115, %p116
      %s118 = ssub.s32 %s28, %s40
      %s119 = ssub.s32 %s29, %s36
      %s120 = sor.u32 %s118, %s119
      %p121 = scmp.eq.s32.totalorder %s120, 0
      %s123 = sadd.s32 %s122, 1
      %s124 = scalar_select %p121, %s122, %s123
      %p127 = pneg %p121
      %p128 = scmp.eq.s32.totalorder %s21, 3
      %p129 = por %p127, %p128
      %p130 = scmp.ne.s32.totalorder %s122, %s125
      %p131 = scmp.eq.s32.totalorder %s21, 0
      %p132 = por %p130, %p131
      %p133 = scmp.ne.s32.totalorder %s122, %s125
      %p134 = scmp.eq.s32.totalorder %s26, 3
      %p135 = por %p133, %p134
      %p136 = scmp.ne.s32.totalorder %s125, %s126
      %p137 = scmp.eq.s32.totalorder %s26, 0
      %p138 = por %p136, %p137
      %p139 = scmp.ne.s32.totalorder %s125, %s126
      %p140 = scmp.eq.s32.totalorder %s27, 3
      %p141 = por %p139, %p140
      %p143 = scmp.ne.s32.totalorder %s126, %s142
      %p144 = scmp.eq.s32.totalorder %s27, 0
      %p145 = por %p143, %p144
      %s146 = ssub.s32 %s28, %s40
      %s147 = ssub.s32 %s29, %s36
      %s148 = sor.u32 %s146, %s147
      %p149 = scmp.eq.s32.totalorder %s148, 0
      %s151 = sadd.s32 %s150, 1
      %s152 = scalar_select %p149, %s150, %s151
      %p155 = pneg %p149
      %p156 = scmp.eq.s32.totalorder %s21, 3
      %p157 = por %p155, %p156
      %p158 = scmp.ne.s32.totalorder %s150, %s153
      %p159 = scmp.eq.s32.totalorder %s21, 0
      %p160 = por %p158, %p159
      %p161 = scmp.ne.s32.totalorder %s150, %s153
      %p162 = scmp.eq.s32.totalorder %s26, 3
      %p163 = por %p161, %p162
      %p164 = scmp.ne.s32.totalorder %s153, %s154
      %p165 = scmp.eq.s32.totalorder %s26, 0
      %p166 = por %p164, %p165
      %p167 = scmp.ne.s32.totalorder %s153, %s154
      %p168 = scmp.eq.s32.totalorder %s27, 3
      %p169 = por %p167, %p168
      %p171 = scmp.ne.s32.totalorder %s154, %s170
      %p172 = scmp.eq.s32.totalorder %s27, 0
      %p173 = por %p171, %p172
      %p174 = scmp.le.s32.totalorder 1, %s21
      %p175 = scmp.lt.s32.totalorder %s21, 5
      %p176 = pnand %p174, %p175
      %p177 = pneg %p176
      // Predicated region
      $region9: #{plain_forward.2} parent=5 // pred_check
        _
      $region10: #{plain_forward.2} parent=5 // pred_check_branch
        %179 = sbr.rel (%p176) target = $region12
      $region11: #{plain_forward.2} parent=5 // pred_region
        %s180 = ssub.s32 %s21, 1
        // Predicated region
        $region13: #{plain_forward.2} parent=11 // pred_check
          %p181 = pneg %p82
        $region14: #{plain_forward.2} parent=11 // pred_check_branch
          %183 = sbr.rel (%p181) target = $region16
        $region15: #{plain_forward.2} parent=11 // pred_region
          %s185 = ssub.s32 640, 640
          %186 = vsyncadd [#allocation6], %s185
          %s187 = sshll.u32 [#allocation5], 4
          %s188 = int_to_ptr.vmem [resolvable:$true] %s187
          %193 = dma.hbm_to_vmem [thread:$0]  %s1, 640, %s188, [#allocation6], 128, 128, 8
        $region16: #{plain_forward.2} parent=11 // pred_fallthru
          _
      $region12: #{plain_forward.2} parent=5 // pred_fallthru
        _
      %p194 = scmp.lt.s32.totalorder %s21, 4
      // Predicated region
      $region17: #{plain_forward.2} parent=5 // pred_check
        %p195 = pneg %p194
      $region18: #{plain_forward.2} parent=5 // pred_check_branch
        %197 = sbr.rel (%p195) target = $region20
      $region19: #{plain_forward.2} parent=5 // pred_region
        // Predicated region
        $region21: #{plain_forward.2} parent=19 // pred_check
          %p198 = pneg %p55
        $region22: #{plain_forward.2} parent=19 // pred_check_branch
          %200 = sbr.rel (%p198) target = $region24
        $region23: #{plain_forward.2} parent=19 // pred_region
          %s201 = sand.u32 %s45, 1
          %s202 = scalar_lea.sflag [#allocation3], %s201
          %s203 = sand.u32 %s45, 1
          %s204 = smul.addr %s203, 240
          %s205 = scalar_lea.vmem [#allocation2], %s204
          %s207 = ssub.s32 3840, 3840
          %208 = vsyncadd %s202, %s207
          %s209 = smul.addr %s29, 30
          %s210 = smul.addr %s28, 60
          %s211 = sadd.s32 %s209, %s210
          %s212 = smul.addr %s211, 128
          %s213 = scalar_lea.hbm %s0, %s212
          %s214 = sshll.u32 %s205, 4
          %s215 = int_to_ptr.vmem [resolvable:$true] %s214
          %220 = dma.hbm_to_vmem [thread:$0]  %s213, 3840, %s215, %s202, 128, 128, 8
        $region24: #{plain_forward.2} parent=19 // pred_fallthru
          _
      $region20: #{plain_forward.2} parent=5 // pred_fallthru
        _
      %p221 = scmp.le.s32.totalorder 1, %s21
      %p222 = scmp.lt.s32.totalorder %s21, 5
      %p223 = pnand %p221, %p222
      %p224 = pneg %p223
      // Predicated region
      $region25: #{plain_forward.2} parent=5 // pred_check
        _
      $region26: #{plain_forward.2} parent=5 // pred_check_branch
        %226 = sbr.rel (%p223) target = $region28
      $region27: #{plain_forward.2} parent=5 // pred_region
        %s227 = ssub.s32 %s21, 1
        %s228 = sand.u32 %s48, 1
        %s229 = scalar_lea.sflag [#allocation3], %s228
        %s230 = sand.u32 %s48, 1
        %s231 = smul.addr %s230, 240
        %s232 = scalar_lea.vmem [#allocation2], %s231
        // Predicated region
        $region29: #{plain_forward.2} parent=27 // pred_check
          %p233 = pneg %p61
        $region30: #{plain_forward.2} parent=27 // pred_check_branch
          %235 = sbr.rel (%p233) target = $region32
        $region31: #{plain_forward.2} parent=27 // pred_region
          %236 = dma.done %s229, 3840
        $region32: #{plain_forward.2} parent=27 // pred_fallthru
          _
        // Predicated region
        $region33: #{plain_forward.2} parent=27 // pred_check
          %p237 = pneg %p82
        $region34: #{plain_forward.2} parent=27 // pred_check_branch
          %239 = sbr.rel (%p237) target = $region36
        $region35: #{plain_forward.2} parent=27 // pred_region
          %240 = dma.done [#allocation6], 640
        $region36: #{plain_forward.2} parent=27 // pred_fallthru
          _
        %s241 = sand.u32 %s48, 1
        %s242 = scalar_lea.sflag [#allocation3], %s241
        %s243 = sand.u32 %s48, 1
        %s244 = smul.addr %s243, 240
        %s245 = scalar_lea.vmem [#allocation2], %s244
        %p246 = pneg %p61
        %p247 = pneg %p58
        %p248 = pneg %p82
        %p249 = pneg %p79
        %p250 = pneg %p110
        %p251 = pneg %p107
        %s252 = sand.u32 %s97, 1
        %s253 = scalar_lea.sflag [#allocation4], %s252
        %s254 = sand.u32 %s97, 1
        %s255 = smul.addr %s254, 8
        %s256 = scalar_lea.vmem [#allocation7], %s255
        %p257 = pneg %p138
        %p258 = pneg %p135
        %s259 = sand.u32 %s26, 1
        %s260 = scalar_lea.sflag [#allocation9], %s259
        %s261 = sand.u32 %s125, 1
        %s262 = smul.addr %s261, 8
        %s263 = scalar_lea.vmem [#allocation8], %s262
        %p264 = pneg %p166
        %p265 = pneg %p163
        %s266 = sand.u32 %s26, 1
        %s267 = scalar_lea.sflag [#allocation9], %s266
        %s268 = sand.u32 %s153, 1
        %s269 = smul.addr %s268, 8
        %s270 = scalar_lea.vmem [#allocation10], %s269
        %v271 = vld [vmem:[%s232] sm:$0xff]
        %v272 = vld [vmem:[%s232 + $0x8] sm:$0xff]
        %v273 = vld [vmem:[%s232 + $0x10] sm:$0x3]
        %v274 = vld [vmem:[%s232 + $0x18] sm:$0xff]
        %v275 = vld [vmem:[%s232 + $0x20] sm:$0xff]
        %v276 = vld [vmem:[%s232 + $0x28] sm:$0x3]
        %v277 = vld [vmem:[%s232 + $0x30] sm:$0xff]
        %v278 = vld [vmem:[%s232 + $0x38] sm:$0xff]
        %v279 = vld [vmem:[%s232 + $0x40] sm:$0x3]
        %v280 = vld [vmem:[%s232 + $0x48] sm:$0xff]
        %v281 = vld [vmem:[%s232 + $0x50] sm:$0xff]
        %v282 = vld [vmem:[%s232 + $0x58] sm:$0x3]
        %v283 = vld [vmem:[%s232 + $0x60] sm:$0xff]
        %v284 = vld [vmem:[%s232 + $0x68] sm:$0xff]
        %v285 = vld [vmem:[%s232 + $0x70] sm:$0x3]
        %v286 = vld [vmem:[%s232 + $0x78] sm:$0xff]
        %v287 = vld [vmem:[%s232 + $0x80] sm:$0xff]
        %v288 = vld [vmem:[%s232 + $0x88] sm:$0x3]
        %v289 = vld [vmem:[%s232 + $0x90] sm:$0xff]
        %v290 = vld [vmem:[%s232 + $0x98] sm:$0xff]
        %v291 = vld [vmem:[%s232 + $0xa0] sm:$0x3]
        %v292 = vld [vmem:[%s232 + $0xa8] sm:$0xff]
        %v293 = vld [vmem:[%s232 + $0xb0] sm:$0xff]
        %v294 = vld [vmem:[%s232 + $0xb8] sm:$0x3]
        %v295 = vld [vmem:[%s232 + $0xc0] sm:$0xff]
        %v296 = vld [vmem:[%s232 + $0xc8] sm:$0xff]
        %v297 = vld [vmem:[%s232 + $0xd0] sm:$0x3]
        %v298 = vld [vmem:[%s232 + $0xd8] sm:$0xff]
        %v299 = vld [vmem:[%s232 + $0xe0] sm:$0xff]
        %v300 = vld [vmem:[%s232 + $0xe8] sm:$0x3]
        %vm325 = vcmask 1046528
        %v326 = vrot.slane %v271, 1
        %v327 = vrot.slane %v272, 1
        %v328 = vsel %vm325, %v326, %v327
        %v329 = vrot.slane %v273, 1
        %v330 = vsel %vm325, %v327, %v329
        %v331 = vrot.slane %v274, 1
        %v332 = vrot.slane %v275, 1
        %v333 = vsel %vm325, %v331, %v332
        %v334 = vrot.slane %v276, 1
        %v335 = vsel %vm325, %v332, %v334
        %v336 = vrot.slane %v277, 1
        %v337 = vrot.slane %v278, 1
        %v338 = vsel %vm325, %v336, %v337
        %v339 = vrot.slane %v279, 1
        %v340 = vsel %vm325, %v337, %v339
        %v341 = vrot.slane %v280, 1
        %v342 = vrot.slane %v281, 1
        %v343 = vsel %vm325, %v341, %v342
        %v344 = vrot.slane %v282, 1
        %v345 = vsel %vm325, %v342, %v344
        %v346 = vrot.slane %v283, 1
        %v347 = vrot.slane %v284, 1
        %v348 = vsel %vm325, %v346, %v347
        %v349 = vrot.slane %v285, 1
        %v350 = vsel %vm325, %v347, %v349
        %v351 = vrot.slane %v286, 1
        %v352 = vrot.slane %v287, 1
        %v353 = vsel %vm325, %v351, %v352
        %v354 = vrot.slane %v288, 1
        %v355 = vsel %vm325, %v352, %v354
        %v356 = vrot.slane %v289, 1
        %v357 = vrot.slane %v290, 1
        %v358 = vsel %vm325, %v356, %v357
        %v359 = vrot.slane %v291, 1
        %v360 = vsel %vm325, %v357, %v359
        %v361 = vrot.slane %v292, 1
        %v362 = vrot.slane %v293, 1
        %v363 = vsel %vm325, %v361, %v362
        %v364 = vrot.slane %v294, 1
        %v365 = vsel %vm325, %v362, %v364
        %366 = vrot.lane.b32.xlu0 %v328, 4
        %v367 = vpop.permute.xlu0 %366
        %368 = vrot.lane.b32.xlu0 %v330, 4
        %v369 = vpop.permute.xlu0 %368
        %370 = vrot.lane.b32.xlu0 %v333, 4
        %v371 = vpop.permute.xlu0 %370
        %372 = vrot.lane.b32.xlu0 %v335, 4
        %v373 = vpop.permute.xlu0 %372
        %374 = vrot.lane.b32.xlu0 %v338, 4
        %v375 = vpop.permute.xlu0 %374
        %376 = vrot.lane.b32.xlu0 %v340, 4
        %v377 = vpop.permute.xlu0 %376
        %378 = vrot.lane.b32.xlu0 %v343, 4
        %v379 = vpop.permute.xlu0 %378
        %380 = vrot.lane.b32.xlu0 %v345, 4
        %v381 = vpop.permute.xlu0 %380
        %382 = vrot.lane.b32.xlu0 %v348, 4
        %v383 = vpop.permute.xlu0 %382
        %384 = vrot.lane.b32.xlu0 %v350, 4
        %v385 = vpop.permute.xlu0 %384
        %386 = vrot.lane.b32.xlu0 %v353, 4
        %v387 = vpop.permute.xlu0 %386
        %388 = vrot.lane.b32.xlu0 %v355, 4
        %v389 = vpop.permute.xlu0 %388
        %390 = vrot.lane.b32.xlu0 %v358, 4
        %v391 = vpop.permute.xlu0 %390
        %392 = vrot.lane.b32.xlu0 %v360, 4
        %v393 = vpop.permute.xlu0 %392
        %394 = vrot.lane.b32.xlu0 %v363, 4
        %v395 = vpop.permute.xlu0 %394
        %396 = vrot.lane.b32.xlu0 %v365, 4
        %v397 = vpop.permute.xlu0 %396
        %vm414 = vcmask 1045504
        %v415 = vrot.slane %v271, 2
        %v416 = vrot.slane %v272, 2
        %v417 = vsel %vm414, %v415, %v416
        %v418 = vrot.slane %v273, 2
        %v419 = vsel %vm414, %v416, %v418
        %v420 = vrot.slane %v274, 2
        %v421 = vrot.slane %v275, 2
        %v422 = vsel %vm414, %v420, %v421
        %v423 = vrot.slane %v276, 2
        %v424 = vsel %vm414, %v421, %v423
        %v425 = vrot.slane %v277, 2
        %v426 = vrot.slane %v278, 2
        %v427 = vsel %vm414, %v425, %v426
        %v428 = vrot.slane %v279, 2
        %v429 = vsel %vm414, %v426, %v428
        %v430 = vrot.slane %v280, 2
        %v431 = vrot.slane %v281, 2
        %v432 = vsel %vm414, %v430, %v431
        %v433 = vrot.slane %v282, 2
        %v434 = vsel %vm414, %v431, %v433
        %v435 = vrot.slane %v283, 2
        %v436 = vrot.slane %v284, 2
        %v437 = vsel %vm414, %v435, %v436
        %v438 = vrot.slane %v285, 2
        %v439 = vsel %vm414, %v436, %v438
        %v440 = vrot.slane %v286, 2
        %v441 = vrot.slane %v287, 2
        %v442 = vsel %vm414, %v440, %v441
        %v443 = vrot.slane %v288, 2
        %v444 = vsel %vm414, %v441, %v443
        %v445 = vrot.slane %v289, 2
        %v446 = vrot.slane %v290, 2
        %v447 = vsel %vm414, %v445, %v446
        %v448 = vrot.slane %v291, 2
        %v449 = vsel %vm414, %v446, %v448
        %v450 = vrot.slane %v292, 2
        %v451 = vrot.slane %v293, 2
        %v452 = vsel %vm414, %v450, %v451
        %v453 = vrot.slane %v294, 2
        %v454 = vsel %vm414, %v451, %v453
        %455 = vrot.lane.b32.xlu0 %v417, 8
        %v456 = vpop.permute.xlu0 %455
        %457 = vrot.lane.b32.xlu0 %v419, 8
        %v458 = vpop.permute.xlu0 %457
        %459 = vrot.lane.b32.xlu0 %v422, 8
        %v460 = vpop.permute.xlu0 %459
        %461 = vrot.lane.b32.xlu0 %v424, 8
        %v462 = vpop.permute.xlu0 %461
        %463 = vrot.lane.b32.xlu0 %v427, 8
        %v464 = vpop.permute.xlu0 %463
        %465 = vrot.lane.b32.xlu0 %v429, 8
        %v466 = vpop.permute.xlu0 %465
        %467 = vrot.lane.b32.xlu0 %v432, 8
        %v468 = vpop.permute.xlu0 %467
        %469 = vrot.lane.b32.xlu0 %v434, 8
        %v470 = vpop.permute.xlu0 %469
        %471 = vrot.lane.b32.xlu0 %v437, 8
        %v472 = vpop.permute.xlu0 %471
        %473 = vrot.lane.b32.xlu0 %v439, 8
        %v474 = vpop.permute.xlu0 %473
        %475 = vrot.lane.b32.xlu0 %v442, 8
        %v476 = vpop.permute.xlu0 %475
        %477 = vrot.lane.b32.xlu0 %v444, 8
        %v478 = vpop.permute.xlu0 %477
        %479 = vrot.lane.b32.xlu0 %v447, 8
        %v480 = vpop.permute.xlu0 %479
        %481 = vrot.lane.b32.xlu0 %v449, 8
        %v482 = vpop.permute.xlu0 %481
        %483 = vrot.lane.b32.xlu0 %v452, 8
        %v484 = vpop.permute.xlu0 %483
        %485 = vrot.lane.b32.xlu0 %v454, 8
        %v486 = vpop.permute.xlu0 %485
        %505 = vrot.lane.b32.xlu0 %v274, 12
        %v506 = vpop.permute.xlu0 %505
        %507 = vrot.lane.b32.xlu0 %v275, 12
        %v508 = vpop.permute.xlu0 %507
        %509 = vrot.lane.b32.xlu0 %v277, 12
        %v510 = vpop.permute.xlu0 %509
        %511 = vrot.lane.b32.xlu0 %v278, 12
        %v512 = vpop.permute.xlu0 %511
        %513 = vrot.lane.b32.xlu0 %v280, 12
        %v514 = vpop.permute.xlu0 %513
        %515 = vrot.lane.b32.xlu0 %v281, 12
        %v516 = vpop.permute.xlu0 %515
        %517 = vrot.lane.b32.xlu0 %v283, 12
        %v518 = vpop.permute.xlu0 %517
        %519 = vrot.lane.b32.xlu0 %v284, 12
        %v520 = vpop.permute.xlu0 %519
        %521 = vrot.lane.b32.xlu0 %v286, 12
        %v522 = vpop.permute.xlu0 %521
        %523 = vrot.lane.b32.xlu0 %v287, 12
        %v524 = vpop.permute.xlu0 %523
        %525 = vrot.lane.b32.xlu0 %v289, 12
        %v526 = vpop.permute.xlu0 %525
        %527 = vrot.lane.b32.xlu0 %v290, 12
        %v528 = vpop.permute.xlu0 %527
        %529 = vrot.lane.b32.xlu0 %v292, 12
        %v530 = vpop.permute.xlu0 %529
        %531 = vrot.lane.b32.xlu0 %v293, 12
        %v532 = vpop.permute.xlu0 %531
        %533 = vrot.lane.b32.xlu0 %v295, 12
        %v534 = vpop.permute.xlu0 %533
        %535 = vrot.lane.b32.xlu0 %v296, 12
        %v536 = vpop.permute.xlu0 %535
        %v554 = vrot.slane %v295, 1
        %v555 = vrot.slane %v296, 1
        %v556 = vsel %vm325, %v554, %v555
        %v557 = vrot.slane %v297, 1
        %v558 = vsel %vm325, %v555, %v557
        %559 = vrot.lane.b32.xlu0 %v333, 16
        %v560 = vpop.permute.xlu0 %559
        %561 = vrot.lane.b32.xlu0 %v335, 16
        %v562 = vpop.permute.xlu0 %561
        %563 = vrot.lane.b32.xlu0 %v338, 16
        %v564 = vpop.permute.xlu0 %563
        %565 = vrot.lane.b32.xlu0 %v340, 16
        %v566 = vpop.permute.xlu0 %565
        %567 = vrot.lane.b32.xlu0 %v343, 16
        %v568 = vpop.permute.xlu0 %567
        %569 = vrot.lane.b32.xlu0 %v345, 16
        %v570 = vpop.permute.xlu0 %569
        %571 = vrot.lane.b32.xlu0 %v348, 16
        %v572 = vpop.permute.xlu0 %571
        %573 = vrot.lane.b32.xlu0 %v350, 16
        %v574 = vpop.permute.xlu0 %573
        %575 = vrot.lane.b32.xlu0 %v353, 16
        %v576 = vpop.permute.xlu0 %575
        %577 = vrot.lane.b32.xlu0 %v355, 16
        %v578 = vpop.permute.xlu0 %577
        %579 = vrot.lane.b32.xlu0 %v358, 16
        %v580 = vpop.permute.xlu0 %579
        %581 = vrot.lane.b32.xlu0 %v360, 16
        %v582 = vpop.permute.xlu0 %581
        %583 = vrot.lane.b32.xlu0 %v363, 16
        %v584 = vpop.permute.xlu0 %583
        %585 = vrot.lane.b32.xlu0 %v365, 16
        %v586 = vpop.permute.xlu0 %585
        %587 = vrot.lane.b32.xlu0 %v556, 16
        %v588 = vpop.permute.xlu0 %587
        %589 = vrot.lane.b32.xlu0 %v558, 16
        %v590 = vpop.permute.xlu0 %589
        %v607 = vrot.slane %v295, 2
        %v608 = vrot.slane %v296, 2
        %v609 = vsel %vm414, %v607, %v608
        %v610 = vrot.slane %v297, 2
        %v611 = vsel %vm414, %v608, %v610
        %612 = vrot.lane.b32.xlu0 %v422, 20
        %v613 = vpop.permute.xlu0 %612
        %614 = vrot.lane.b32.xlu0 %v424, 20
        %v615 = vpop.permute.xlu0 %614
        %616 = vrot.lane.b32.xlu0 %v427, 20
        %v617 = vpop.permute.xlu0 %616
        %618 = vrot.lane.b32.xlu0 %v429, 20
        %v619 = vpop.permute.xlu0 %618
        %620 = vrot.lane.b32.xlu0 %v432, 20
        %v621 = vpop.permute.xlu0 %620
        %622 = vrot.lane.b32.xlu0 %v434, 20
        %v623 = vpop.permute.xlu0 %622
        %624 = vrot.lane.b32.xlu0 %v437, 20
        %v625 = vpop.permute.xlu0 %624
        %626 = vrot.lane.b32.xlu0 %v439, 20
        %v627 = vpop.permute.xlu0 %626
        %628 = vrot.lane.b32.xlu0 %v442, 20
        %v629 = vpop.permute.xlu0 %628
        %630 = vrot.lane.b32.xlu0 %v444, 20
        %v631 = vpop.permute.xlu0 %630
        %632 = vrot.lane.b32.xlu0 %v447, 20
        %v633 = vpop.permute.xlu0 %632
        %634 = vrot.lane.b32.xlu0 %v449, 20
        %v635 = vpop.permute.xlu0 %634
        %636 = vrot.lane.b32.xlu0 %v452, 20
        %v637 = vpop.permute.xlu0 %636
        %638 = vrot.lane.b32.xlu0 %v454, 20
        %v639 = vpop.permute.xlu0 %638
        %640 = vrot.lane.b32.xlu0 %v609, 20
        %v641 = vpop.permute.xlu0 %640
        %642 = vrot.lane.b32.xlu0 %v611, 20
        %v643 = vpop.permute.xlu0 %642
        %662 = vrot.lane.b32.xlu0 %v277, 24
        %v663 = vpop.permute.xlu0 %662
        %664 = vrot.lane.b32.xlu0 %v278, 24
        %v665 = vpop.permute.xlu0 %664
        %666 = vrot.lane.b32.xlu0 %v280, 24
        %v667 = vpop.permute.xlu0 %666
        %668 = vrot.lane.b32.xlu0 %v281, 24
        %v669 = vpop.permute.xlu0 %668
        %670 = vrot.lane.b32.xlu0 %v283, 24
        %v671 = vpop.permute.xlu0 %670
        %672 = vrot.lane.b32.xlu0 %v284, 24
        %v673 = vpop.permute.xlu0 %672
        %674 = vrot.lane.b32.xlu0 %v286, 24
        %v675 = vpop.permute.xlu0 %674
        %676 = vrot.lane.b32.xlu0 %v287, 24
        %v677 = vpop.permute.xlu0 %676
        %678 = vrot.lane.b32.xlu0 %v289, 24
        %v679 = vpop.permute.xlu0 %678
        %680 = vrot.lane.b32.xlu0 %v290, 24
        %v681 = vpop.permute.xlu0 %680
        %682 = vrot.lane.b32.xlu0 %v292, 24
        %v683 = vpop.permute.xlu0 %682
        %684 = vrot.lane.b32.xlu0 %v293, 24
        %v685 = vpop.permute.xlu0 %684
        %686 = vrot.lane.b32.xlu0 %v295, 24
        %v687 = vpop.permute.xlu0 %686
        %688 = vrot.lane.b32.xlu0 %v296, 24
        %v689 = vpop.permute.xlu0 %688
        %690 = vrot.lane.b32.xlu0 %v298, 24
        %v691 = vpop.permute.xlu0 %690
        %692 = vrot.lane.b32.xlu0 %v299, 24
        %v693 = vpop.permute.xlu0 %692
        %v711 = vrot.slane %v298, 1
        %v712 = vrot.slane %v299, 1
        %v713 = vsel %vm325, %v711, %v712
        %v714 = vrot.slane %v300, 1
        %v715 = vsel %vm325, %v712, %v714
        %716 = vrot.lane.b32.xlu0 %v338, 28
        %v717 = vpop.permute.xlu0 %716
        %718 = vrot.lane.b32.xlu0 %v340, 28
        %v719 = vpop.permute.xlu0 %718
        %720 = vrot.lane.b32.xlu0 %v343, 28
        %v721 = vpop.permute.xlu0 %720
        %722 = vrot.lane.b32.xlu0 %v345, 28
        %v723 = vpop.permute.xlu0 %722
        %724 = vrot.lane.b32.xlu0 %v348, 28
        %v725 = vpop.permute.xlu0 %724
        %726 = vrot.lane.b32.xlu0 %v350, 28
        %v727 = vpop.permute.xlu0 %726
        %728 = vrot.lane.b32.xlu0 %v353, 28
        %v729 = vpop.permute.xlu0 %728
        %730 = vrot.lane.b32.xlu0 %v355, 28
        %v731 = vpop.permute.xlu0 %730
        %732 = vrot.lane.b32.xlu0 %v358, 28
        %v733 = vpop.permute.xlu0 %732
        %734 = vrot.lane.b32.xlu0 %v360, 28
        %v735 = vpop.permute.xlu0 %734
        %736 = vrot.lane.b32.xlu0 %v363, 28
        %v737 = vpop.permute.xlu0 %736
        %738 = vrot.lane.b32.xlu0 %v365, 28
        %v739 = vpop.permute.xlu0 %738
        %740 = vrot.lane.b32.xlu0 %v556, 28
        %v741 = vpop.permute.xlu0 %740
        %742 = vrot.lane.b32.xlu0 %v558, 28
        %v743 = vpop.permute.xlu0 %742
        %744 = vrot.lane.b32.xlu0 %v713, 28
        %v745 = vpop.permute.xlu0 %744
        %746 = vrot.lane.b32.xlu0 %v715, 28
        %v747 = vpop.permute.xlu0 %746
        %v764 = vrot.slane %v298, 2
        %v765 = vrot.slane %v299, 2
        %v766 = vsel %vm414, %v764, %v765
        %v767 = vrot.slane %v300, 2
        %v768 = vsel %vm414, %v765, %v767
        %769 = vrot.lane.b32.xlu0 %v427, 32
        %v770 = vpop.permute.xlu0 %769
        %771 = vrot.lane.b32.xlu0 %v429, 32
        %v772 = vpop.permute.xlu0 %771
        %773 = vrot.lane.b32.xlu0 %v432, 32
        %v774 = vpop.permute.xlu0 %773
        %775 = vrot.lane.b32.xlu0 %v434, 32
        %v776 = vpop.permute.xlu0 %775
        %777 = vrot.lane.b32.xlu0 %v437, 32
        %v778 = vpop.permute.xlu0 %777
        %779 = vrot.lane.b32.xlu0 %v439, 32
        %v780 = vpop.permute.xlu0 %779
        %781 = vrot.lane.b32.xlu0 %v442, 32
        %v782 = vpop.permute.xlu0 %781
        %783 = vrot.lane.b32.xlu0 %v444, 32
        %v784 = vpop.permute.xlu0 %783
        %785 = vrot.lane.b32.xlu0 %v447, 32
        %v786 = vpop.permute.xlu0 %785
        %787 = vrot.lane.b32.xlu0 %v449, 32
        %v788 = vpop.permute.xlu0 %787
        %789 = vrot.lane.b32.xlu0 %v452, 32
        %v790 = vpop.permute.xlu0 %789
        %791 = vrot.lane.b32.xlu0 %v454, 32
        %v792 = vpop.permute.xlu0 %791
        %793 = vrot.lane.b32.xlu0 %v609, 32
        %v794 = vpop.permute.xlu0 %793
        %795 = vrot.lane.b32.xlu0 %v611, 32
        %v796 = vpop.permute.xlu0 %795
        %797 = vrot.lane.b32.xlu0 %v766, 32
        %v798 = vpop.permute.xlu0 %797
        %799 = vrot.lane.b32.xlu0 %v768, 32
        %v800 = vpop.permute.xlu0 %799
        %vm817 = vcmask 31744
        %v818 = vsel %vm817, %v271, %v367
        %v819 = vsel %vm817, %v272, %v369
        %v820 = vsel %vm817, %v274, %v371
        %v821 = vsel %vm817, %v275, %v373
        %v822 = vsel %vm817, %v277, %v375
        %v823 = vsel %vm817, %v278, %v377
        %v824 = vsel %vm817, %v280, %v379
        %v825 = vsel %vm817, %v281, %v381
        %v826 = vsel %vm817, %v283, %v383
        %v827 = vsel %vm817, %v284, %v385
        %v828 = vsel %vm817, %v286, %v387
        %v829 = vsel %vm817, %v287, %v389
        %v830 = vsel %vm817, %v289, %v391
        %v831 = vsel %vm817, %v290, %v393
        %v832 = vsel %vm817, %v292, %v395
        %v833 = vsel %vm817, %v293, %v397
        %vm834 = vcmask 64512
        %v835 = vsel %vm834, %v818, %v456
        %v836 = vsel %vm834, %v819, %v458
        %v837 = vsel %vm834, %v820, %v460
        %v838 = vsel %vm834, %v821, %v462
        %v839 = vsel %vm834, %v822, %v464
        %v840 = vsel %vm834, %v823, %v466
        %v841 = vsel %vm834, %v824, %v468
        %v842 = vsel %vm834, %v825, %v470
        %v843 = vsel %vm834, %v826, %v472
        %v844 = vsel %vm834, %v827, %v474
        %v845 = vsel %vm834, %v828, %v476
        %v846 = vsel %vm834, %v829, %v478
        %v847 = vsel %vm834, %v830, %v480
        %v848 = vsel %vm834, %v831, %v482
        %v849 = vsel %vm834, %v832, %v484
        %v850 = vsel %vm834, %v833, %v486
        %vm851 = vcmask 97280
        %v852 = vsel %vm851, %v835, %v506
        %v853 = vsel %vm851, %v836, %v508
        %v854 = vsel %vm851, %v837, %v510
        %v855 = vsel %vm851, %v838, %v512
        %v856 = vsel %vm851, %v839, %v514
        %v857 = vsel %vm851, %v840, %v516
        %v858 = vsel %vm851, %v841, %v518
        %v859 = vsel %vm851, %v842, %v520
        %v860 = vsel %vm851, %v843, %v522
        %v861 = vsel %vm851, %v844, %v524
        %v862 = vsel %vm851, %v845, %v526
        %v863 = vsel %vm851, %v846, %v528
        %v864 = vsel %vm851, %v847, %v530
        %v865 = vsel %vm851, %v848, %v532
        %v866 = vsel %vm851, %v849, %v534
        %v867 = vsel %vm851, %v850, %v536
        %vm868 = vcmask 130048
        %v869 = vsel %vm868, %v852, %v560
        %v870 = vsel %vm868, %v853, %v562
        %v871 = vsel %vm868, %v854, %v564
        %v872 = vsel %vm868, %v855, %v566
        %v873 = vsel %vm868, %v856, %v568
        %v874 = vsel %vm868, %v857, %v570
        %v875 = vsel %vm868, %v858, %v572
        %v876 = vsel %vm868, %v859, %v574
        %v877 = vsel %vm868, %v860, %v576
        %v878 = vsel %vm868, %v861, %v578
        %v879 = vsel %vm868, %v862, %v580
        %v880 = vsel %vm868, %v863, %v582
        %v881 = vsel %vm868, %v864, %v584
        %v882 = vsel %vm868, %v865, %v586
        %v883 = vsel %vm868, %v866, %v588
        %v884 = vsel %vm868, %v867, %v590
        %vm885 = vcmask 162816
        %v886 = vsel %vm885, %v869, %v613
        %v887 = vsel %vm885, %v870, %v615
        %v888 = vsel %vm885, %v871, %v617
        %v889 = vsel %vm885, %v872, %v619
        %v890 = vsel %vm885, %v873, %v621
        %v891 = vsel %vm885, %v874, %v623
        %v892 = vsel %vm885, %v875, %v625
        %v893 = vsel %vm885, %v876, %v627
        %v894 = vsel %vm885, %v877, %v629
        %v895 = vsel %vm885, %v878, %v631
        %v896 = vsel %vm885, %v879, %v633
        %v897 = vsel %vm885, %v880, %v635
        %v898 = vsel %vm885, %v881, %v637
        %v899 = vsel %vm885, %v882, %v639
        %v900 = vsel %vm885, %v883, %v641
        %v901 = vsel %vm885, %v884, %v643
        %vm902 = vcmask 195584
        %v903 = vsel %vm902, %v886, %v663
        %v904 = vsel %vm902, %v887, %v665
        %v905 = vsel %vm902, %v888, %v667
        %v906 = vsel %vm902, %v889, %v669
        %v907 = vsel %vm902, %v890, %v671
        %v908 = vsel %vm902, %v891, %v673
        %v909 = vsel %vm902, %v892, %v675
        %v910 = vsel %vm902, %v893, %v677
        %v911 = vsel %vm902, %v894, %v679
        %v912 = vsel %vm902, %v895, %v681
        %v913 = vsel %vm902, %v896, %v683
        %v914 = vsel %vm902, %v897, %v685
        %v915 = vsel %vm902, %v898, %v687
        %v916 = vsel %vm902, %v899, %v689
        %v917 = vsel %vm902, %v900, %v691
        %v918 = vsel %vm902, %v901, %v693
        %vm919 = vcmask 228352
        %v920 = vsel %vm919, %v903, %v717
        %v921 = vsel %vm919, %v904, %v719
        %v922 = vsel %vm919, %v905, %v721
        %v923 = vsel %vm919, %v906, %v723
        %v924 = vsel %vm919, %v907, %v725
        %v925 = vsel %vm919, %v908, %v727
        %v926 = vsel %vm919, %v909, %v729
        %v927 = vsel %vm919, %v910, %v731
        %v928 = vsel %vm919, %v911, %v733
        %v929 = vsel %vm919, %v912, %v735
        %v930 = vsel %vm919, %v913, %v737
        %v931 = vsel %vm919, %v914, %v739
        %v932 = vsel %vm919, %v915, %v741
        %v933 = vsel %vm919, %v916, %v743
        %v934 = vsel %vm919, %v917, %v745
        %v935 = vsel %vm919, %v918, %v747
        %vm936 = vcmask 261120
        %v937 = vsel %vm936, %v920, %v770
        %v938 = vsel %vm936, %v921, %v772
        %v939 = vsel %vm936, %v922, %v774
        %v940 = vsel %vm936, %v923, %v776
        %v941 = vsel %vm936, %v924, %v778
        %v942 = vsel %vm936, %v925, %v780
        %v943 = vsel %vm936, %v926, %v782
        %v944 = vsel %vm936, %v927, %v784
        %v945 = vsel %vm936, %v928, %v786
        %v946 = vsel %vm936, %v929, %v788
        %v947 = vsel %vm936, %v930, %v790
        %v948 = vsel %vm936, %v931, %v792
        %v949 = vsel %vm936, %v932, %v794
        %v950 = vsel %vm936, %v933, %v796
        %v951 = vsel %vm936, %v934, %v798
        %v952 = vsel %vm936, %v935, %v800
        %v953 = vld [vmem:[#allocation5] sm:$0xff]
        %v954 = vld [vmem:[#allocation5 + $0x8] sm:$0xff]
        %v955 = vld [vmem:[#allocation5 + $0x10] sm:$0xff]
        %v956 = vld [vmem:[#allocation5 + $0x18] sm:$0xff]
        %v957 = vld [vmem:[#allocation5 + $0x20] sm:$0xf]
        %vm958 = vcmask 293888
        %v960 = vsel %vm958, %v937, 0
        %v963 = vsel %vm958, %v938, 0
        %v966 = vsel %vm958, %v939, 0
        %v969 = vsel %vm958, %v940, 0
        %v972 = vsel %vm958, %v941, 0
        %v975 = vsel %vm958, %v942, 0
        %v978 = vsel %vm958, %v943, 0
        %v981 = vsel %vm958, %v944, 0
        %v984 = vsel %vm958, %v945, 0
        %v987 = vsel %vm958, %v946, 0
        %v990 = vsel %vm958, %v947, 0
        %v993 = vsel %vm958, %v948, 0
        %v996 = vsel %vm958, %v949, 0
        %v999 = vsel %vm958, %v950, 0
        %v1002 = vsel %vm958, %v951, 0
        %v1005 = vsel %vm958, %v952, 0
        %vm1007 = vcmask 1043456
        %v1009 = vsel %vm1007, %v957, 0
        %1011 = vmatprep.subr.mxu0 0.0
        %1012 = vmatpush1.msra.mxu0 %v953
        %1013 = vmatprep.subr.mxu0 0.0
        %1014 = vmatpush1.msra.mxu0 %v954
        %1015 = vmatprep.subr.mxu0 0.0
        %1016 = vmatpush1.msra.mxu0 %v955
        %1017 = vmatprep.subr.mxu0 0.0
        %1018 = vmatpush1.msra.mxu0 %v956
        %1019 = vmatprep.subr.mxu0 0.0
        %1020 = vmatpush1.msra.mxu0 %v1009
        %1021 = vmatprep.subr.mxu0 0.0
        %1022 = vmatpush1.msra.mxu0 0.0
        %1023 = vmatprep.subr.mxu0 0.0
        %1024 = vmatpush1.msra.mxu0 0.0
        %1025 = vmatprep.subr.mxu0 0.0
        %1026 = vmatpush1.msra.mxu0 0.0
        %1027 = vmatprep.subr.mxu0 0.0
        %1028 = vmatpush1.msra.mxu0 0.0
        %1029 = vmatprep.subr.mxu0 0.0
        %1030 = vmatpush1.msra.mxu0 0.0
        %1031 = vmatprep.subr.mxu0 0.0
        %1032 = vmatpush1.msra.mxu0 0.0
        %1033 = vmatprep.subr.mxu0 0.0
        %1034 = vmatpush1.msra.mxu0 0.0
        %1035 = vmatprep.subr.mxu0 0.0
        %1036 = vmatpush1.msra.mxu0 0.0
        %1037 = vmatprep.subr.mxu0 0.0
        %1038 = vmatpush1.msra.mxu0 0.0
        %1039 = vmatprep.subr.mxu0 0.0
        %1040 = vmatpush1.msra.mxu0 0.0
        %1041 = vmatprep.subr.mxu0 0.0
        %1042 = vmatpush1.msra.mxu0 0.0
        %1043 = vmatprep.subr.mxu0 0.0
        %1044 = vmatpush1.msra.mxu0 0.0
        %1045 = vmatprep.subr.mxu0 0.0
        %1046 = vmatpush1.msra.mxu0 0.0
        %1047 = vmatprep.subr.mxu0 0.0
        %1048 = vmatpush1.msra.mxu0 0.0
        %1049 = vmatprep.subr.mxu0 0.0
        %1050 = vmatpush1.msra.mxu0 0.0
        %1051 = vmatprep.subr.mxu0 0.0
        %1052 = vmatpush1.msra.mxu0 0.0
        %1053 = vmatprep.subr.mxu0 0.0
        %1054 = vmatpush1.msra.mxu0 0.0
        %1055 = vmatprep.subr.mxu0 0.0
        %1056 = vmatpush1.msra.mxu0 0.0
        %1057 = vmatprep.subr.mxu0 0.0
        %1058 = vmatpush1.msra.mxu0 0.0
        %1059 = vmatprep.subr.mxu0 0.0
        %1060 = vmatpush1.msra.mxu0 0.0
        %1061 = vmatprep.subr.mxu0 0.0
        %1062 = vmatpush1.msra.mxu0 0.0
        %1063 = vmatprep.subr.mxu0 0.0
        %1064 = vmatpush1.msra.mxu0 0.0
        %1065 = vmatprep.subr.mxu0 0.0
        %1066 = vmatpush1.msra.mxu0 0.0
        %1067 = vmatprep.subr.mxu0 0.0
        %1068 = vmatpush1.msra.mxu0 0.0
        %1069 = vmatprep.subr.mxu0 0.0
        %1070 = vmatpush1.msra.mxu0 0.0
        %1071 = vmatprep.subr.mxu0 0.0
        %1072 = vmatpush1.msra.mxu0 0.0
        %1073 = vmatprep.subr.mxu0 0.0
        %1074 = vmatpush1.msra.mxu0 0.0
        %1075 = vmatprep.mubr.f32.mxu0 0.0
        %1076 = vmatmul.mubr.f32.gmra.mrb[0].mxu0 %v960
        %v1077 = vpop.f32.mrb[0].mxu0
        %v1078 = vadd.f32 0.0, %v1077
        %v1079 = vpop.f32.mrb[0].mxu0
        %1080 = vmatprep.mubr.f32.mxu0 0.0
        %1081 = vmatmul.mubr.f32.gmra.mrb[0].mxu0 %v963
        %v1082 = vpop.f32.mrb[0].mxu0
        %v1083 = vadd.f32 0.0, %v1082
        %v1084 = vpop.f32.mrb[0].mxu0
        %1085 = vmatprep.mubr.f32.mxu0 0.0
        %1086 = vmatmul.mubr.f32.gmra.mrb[0].mxu0 %v966
        %v1087 = vpop.f32.mrb[0].mxu0
        %v1088 = vadd.f32 0.0, %v1087
        %v1089 = vpop.f32.mrb[0].mxu0
        %1090 = vmatprep.mubr.f32.mxu0 0.0
        %1091 = vmatmul.mubr.f32.gmra.mrb[0].mxu0 %v969
        %v1092 = vpop.f32.mrb[0].mxu0
        %v1093 = vadd.f32 0.0, %v1092
        %v1094 = vpop.f32.mrb[0].mxu0
        %1095 = vmatprep.mubr.f32.mxu0 0.0
        %1096 = vmatmul.mubr.f32.gmra.mrb[0].mxu0 %v972
        %v1097 = vpop.f32.mrb[0].mxu0
        %v1098 = vadd.f32 0.0, %v1097
        %v1099 = vpop.f32.mrb[0].mxu0
        %1100 = vmatprep.mubr.f32.mxu0 0.0
        %1101 = vmatmul.mubr.f32.gmra.mrb[0].mxu0 %v975
        %v1102 = vpop.f32.mrb[0].mxu0
        %v1103 = vadd.f32 0.0, %v1102
        %v1104 = vpop.f32.mrb[0].mxu0
        %1105 = vmatprep.mubr.f32.mxu0 0.0
        %1106 = vmatmul.mubr.f32.gmra.mrb[0].mxu0 %v978
        %v1107 = vpop.f32.mrb[0].mxu0
        %v1108 = vadd.f32 0.0, %v1107
        %v1109 = vpop.f32.mrb[0].mxu0
        %1110 = vmatprep.mubr.f32.mxu0 0.0
        %1111 = vmatmul.mubr.f32.gmra.mrb[0].mxu0 %v981
        %v1112 = vpop.f32.mrb[0].mxu0
        %v1113 = vadd.f32 0.0, %v1112
        %v1114 = vpop.f32.mrb[0].mxu0
        %1115 = vmatprep.mubr.f32.mxu0 0.0
        %1116 = vmatmul.mubr.f32.gmra.mrb[0].mxu0 %v984
        %v1117 = vpop.f32.mrb[0].mxu0
        %v1118 = vadd.f32 0.0, %v1117
        %v1119 = vpop.f32.mrb[0].mxu0
        %1120 = vmatprep.mubr.f32.mxu0 0.0
        %1121 = vmatmul.mubr.f32.gmra.mrb[0].mxu0 %v987
        %v1122 = vpop.f32.mrb[0].mxu0
        %v1123 = vadd.f32 0.0, %v1122
        %v1124 = vpop.f32.mrb[0].mxu0
        %1125 = vmatprep.mubr.f32.mxu0 0.0
        %1126 = vmatmul.mubr.f32.gmra.mrb[0].mxu0 %v990
        %v1127 = vpop.f32.mrb[0].mxu0
        %v1128 = vadd.f32 0.0, %v1127
        %v1129 = vpop.f32.mrb[0].mxu0
        %1130 = vmatprep.mubr.f32.mxu0 0.0
        %1131 = vmatmul.mubr.f32.gmra.mrb[0].mxu0 %v993
        %v1132 = vpop.f32.mrb[0].mxu0
        %v1133 = vadd.f32 0.0, %v1132
        %v1134 = vpop.f32.mrb[0].mxu0
        %1135 = vmatprep.mubr.f32.mxu0 0.0
        %1136 = vmatmul.mubr.f32.gmra.mrb[0].mxu0 %v996
        %v1137 = vpop.f32.mrb[0].mxu0
        %v1138 = vadd.f32 0.0, %v1137
        %v1139 = vpop.f32.mrb[0].mxu0
        %1140 = vmatprep.mubr.f32.mxu0 0.0
        %1141 = vmatmul.mubr.f32.gmra.mrb[0].mxu0 %v999
        %v1142 = vpop.f32.mrb[0].mxu0
        %v1143 = vadd.f32 0.0, %v1142
        %v1144 = vpop.f32.mrb[0].mxu0
        %1145 = vmatprep.mubr.f32.mxu0 0.0
        %1146 = vmatmul.mubr.f32.gmra.mrb[0].mxu0 %v1002
        %v1147 = vpop.f32.mrb[0].mxu0
        %v1148 = vadd.f32 0.0, %v1147
        %v1149 = vpop.f32.mrb[0].mxu0
        %1150 = vmatprep.mubr.f32.mxu0 0.0
        %1151 = vmatmul.mubr.f32.gmra.mrb[0].mxu0 %v1005
        %v1152 = vpop.f32.mrb[0].mxu0
        %v1153 = vadd.f32 0.0, %v1152
        %v1154 = vpop.f32.mrb[0].mxu0
        %1155 = vdwg.mxu0
        %1156 = vxpose.xlu0.b32.start [1/16] %v1078, 128
        %1157 = vxpose.xlu0.b32.cont [2/16] %v1083, 128
        %1158 = vxpose.xlu0.b32.cont [3/16] %v1088, 128
        %1159 = vxpose.xlu0.b32.cont [4/16] %v1093, 128
        %1160 = vxpose.xlu0.b32.cont [5/16] %v1098, 128
        %1161 = vxpose.xlu0.b32.cont [6/16] %v1103, 128
        %1162 = vxpose.xlu0.b32.cont [7/16] %v1108, 128
        %1163 = vxpose.xlu0.b32.cont [8/16] %v1113, 128
        %1164 = vxpose.xlu0.b32.cont [9/16] %v1118, 128
        %1165 = vxpose.xlu0.b32.cont [10/16] %v1123, 128
        %1166 = vxpose.xlu0.b32.cont [11/16] %v1128, 128
        %1167 = vxpose.xlu0.b32.cont [12/16] %v1133, 128
        %1168 = vxpose.xlu0.b32.cont [13/16] %v1138, 128
        %1169 = vxpose.xlu0.b32.cont [14/16] %v1143, 128
        %1170 = vxpose.xlu0.b32.cont [15/16] %v1148, 128
        %1171 = vxpose.xlu0.b32.end [16/16] %v1153, 128
        %v1172 = vpop.trf.xlu0
        %v1173 = vpop.trf.xlu0
        %v1174 = vpop.trf.xlu0
        %v1175 = vpop.trf.xlu0
        %v1176 = vpop.trf.xlu0
        %v1177 = vpop.trf.xlu0
        %v1178 = vpop.trf.xlu0
        %v1179 = vpop.trf.xlu0
        %v1180 = vpop.trf.xlu0
        %v1181 = vpop.trf.xlu0
        %v1182 = vpop.trf.xlu0
        %v1183 = vpop.trf.xlu0
        %v1184 = vpop.trf.xlu0
        %v1185 = vpop.trf.xlu0
        %v1186 = vpop.trf.xlu0
        %v1187 = vpop.trf.xlu0
        %1188 = vadd.xlane.f32.xlu0 %v1172
        %v1189 = vpop.xlane.xlu0 %1188
        %vm1190 = vcmask 7168
        %1191 = vst.msk [vmem:[%s263] sm:$0xff] %vm1190, %v1189
        %v1192 = vmul.f32 %v1172, %v1172
        %1193 = vadd.xlane.f32.xlu0 %v1192
        %v1194 = vpop.xlane.xlu0 %1193
        %1195 = vst.msk [vmem:[%s270] sm:$0xff] %vm1190, %v1194
        %1196 = vst [vmem:[%s256] sm:$0xff] %v1172
        %s1197 = sand.u32 %s97, 1
        %s1198 = scalar_lea.sflag [#allocation4], %s1197
        %s1199 = sand.u32 %s97, 1
        %s1200 = smul.addr %s1199, 8
        %s1201 = scalar_lea.vmem [#allocation7], %s1200
        %s1202 = sand.u32 %s26, 1
        %s1203 = scalar_lea.sflag [#allocation9], %s1202
        %s1204 = sand.u32 %s125, 1
        %s1205 = smul.addr %s1204, 8
        %s1206 = scalar_lea.vmem [#allocation8], %s1205
        %s1207 = sand.u32 %s26, 1
        %s1208 = scalar_lea.sflag [#allocation9], %s1207
        %s1209 = sand.u32 %s153, 1
        %s1210 = smul.addr %s1209, 8
        %s1211 = scalar_lea.vmem [#allocation10], %s1210
        // Predicated region
        $region37: #{plain_forward.2} parent=27 // pred_check
          %p1212 = pneg %p107
        $region38: #{plain_forward.2} parent=27 // pred_check_branch
          %1214 = sbr.rel (%p1212) target = $region40
        $region39: #{plain_forward.2} parent=27 // pred_region
          %s1216 = ssub.s32 128, 128
          %1217 = vsyncadd %s1198, %s1216
          %s1218 = smul.addr %s30, 2
          %s1219 = sadd.s32 %s31, %s1218
          %s1220 = smul.addr %s1219, 128
          %s1221 = scalar_lea.hbm %s2, %s1220
          %s1223 = sshll.u32 %s1201, 4
          %s1224 = int_to_ptr.vmem [resolvable:$true] %s1223
          %1226 = dma.vmem_to_hbm [thread:$0]  %s1224, 128, %s1221, %s1198
        $region40: #{plain_forward.2} parent=27 // pred_fallthru
          _
        // Predicated region
        $region41: #{plain_forward.2} parent=27 // pred_check
          %p1227 = pneg %p135
        $region42: #{plain_forward.2} parent=27 // pred_check_branch
          %1229 = sbr.rel (%p1227) target = $region44
        $region43: #{plain_forward.2} parent=27 // pred_region
          %s1231 = ssub.s32 128, 128
          %1232 = vsyncadd %s1203, %s1231
          %s1233 = smul.addr %s30, 2
          %s1234 = sadd.s32 %s31, %s1233
          %s1235 = smul.addr %s1234, 128
          %s1236 = scalar_lea.hbm %s3, %s1235
          %s1238 = sshll.u32 %s1206, 4
          %s1239 = int_to_ptr.vmem [resolvable:$true] %s1238
          %1241 = dma.vmem_to_hbm [thread:$0]  %s1239, 128, %s1236, %s1203
        $region44: #{plain_forward.2} parent=27 // pred_fallthru
          _
        // Predicated region
        $region45: #{plain_forward.2} parent=27 // pred_check
          %p1242 = pneg %p163
        $region46: #{plain_forward.2} parent=27 // pred_check_branch
          %1244 = sbr.rel (%p1242) target = $region48
        $region47: #{plain_forward.2} parent=27 // pred_region
          %s1246 = ssub.s32 128, 128
          %1247 = vsyncadd %s1208, %s1246
          %s1248 = smul.addr %s30, 2
          %s1249 = sadd.s32 %s31, %s1248
          %s1250 = smul.addr %s1249, 128
          %s1251 = scalar_lea.hbm %s4, %s1250
          %s1253 = sshll.u32 %s1211, 4
          %s1254 = int_to_ptr.vmem [resolvable:$true] %s1253
          %1256 = dma.vmem_to_hbm [thread:$0]  %s1254, 128, %s1251, %s1208
        $region48: #{plain_forward.2} parent=27 // pred_fallthru
          _
      $region28: #{plain_forward.2} parent=5 // pred_fallthru
        _
      %p1257 = scmp.le.s32.totalorder 2, %s21
      // Predicated region
      $region49: #{plain_forward.2} parent=5 // pred_check
        %p1258 = pneg %p1257
      $region50: #{plain_forward.2} parent=5 // pred_check_branch
        %1260 = sbr.rel (%p1258) target = $region52
      $region51: #{plain_forward.2} parent=5 // pred_region
        %s1261 = ssub.s32 %s21, 2
        // Predicated region
        $region53: #{plain_forward.2} parent=51 // pred_check
          %p1262 = pneg %p113
        $region54: #{plain_forward.2} parent=51 // pred_check_branch
          %1264 = sbr.rel (%p1262) target = $region56
        $region55: #{plain_forward.2} parent=51 // pred_region
          %s1265 = sand.u32 %s98, 1
          %s1266 = scalar_lea.sflag [#allocation4], %s1265
          %s1267 = sand.u32 %s98, 1
          %s1268 = smul.addr %s1267, 8
          %s1269 = scalar_lea.vmem [#allocation7], %s1268
          %1270 = dma.done %s1266, 128
        $region56: #{plain_forward.2} parent=51 // pred_fallthru
          _
        // Predicated region
        $region57: #{plain_forward.2} parent=51 // pred_check
          %p1271 = pneg %p141
        $region58: #{plain_forward.2} parent=51 // pred_check_branch
          %1273 = sbr.rel (%p1271) target = $region60
        $region59: #{plain_forward.2} parent=51 // pred_region
          %s1274 = sand.u32 %s27, 1
          %s1275 = scalar_lea.sflag [#allocation9], %s1274
          %s1276 = sand.u32 %s126, 1
          %s1277 = smul.addr %s1276, 8
          %s1278 = scalar_lea.vmem [#allocation8], %s1277
          %1279 = dma.done %s1275, 128
        $region60: #{plain_forward.2} parent=51 // pred_fallthru
          _
        // Predicated region
        $region61: #{plain_forward.2} parent=51 // pred_check
          %p1280 = pneg %p169
        $region62: #{plain_forward.2} parent=51 // pred_check_branch
          %1282 = sbr.rel (%p1280) target = $region64
        $region63: #{plain_forward.2} parent=51 // pred_region
          %s1283 = sand.u32 %s27, 1
          %s1284 = scalar_lea.sflag [#allocation9], %s1283
          %s1285 = sand.u32 %s154, 1
          %s1286 = smul.addr %s1285, 8
          %s1287 = scalar_lea.vmem [#allocation10], %s1286
          %1288 = dma.done %s1284, 128
        $region64: #{plain_forward.2} parent=51 // pred_fallthru
          _
      $region52: #{plain_forward.2} parent=5 // pred_fallthru
        _
    $region6: #{plain_forward.2} parent=1 // loop_footer
      %s25 = sadd.s32 1, %s21
    $region7: #{plain_forward.2} parent=1 // loop_footer_branch
      %20 = sbr.rel target = $region3
    $region8: #{plain_forward.2} parent=1 // loop_exit
      _
    %1289 = vsyncpa [#allocation3], 1
    %s1290 = scalar_lea.sflag [#allocation3], 1
    %1291 = vsyncpa %s1290, 1
    %1292 = vsyncpa [#allocation6], 1
    %1293 = vsyncpa [#allocation4], 1
    %s1294 = scalar_lea.sflag [#allocation4], 1
    %1295 = vsyncpa %s1294, 1
    %1296 = vsyncpa [#allocation9], 1
    %s1297 = scalar_lea.sflag [#allocation9], 1
    %1298 = vsyncpa %s1297, 1

</llo_original>
